<compile_context>
chip_gen: v6e
topology: v6e:2x2x1
jax: 0.10.0
libtpu: 0.0.40
codegen_flags: <defaults>
</compile_context>

<pallas_src>
import jax
import jax.numpy as jnp
from jax import lax
from jax.experimental import pallas as pl
from jax.experimental.pallas import tpu as pltpu

# Small, module-consistent hyper-parameters
BATCH = 2
SEQ_LEN = 8
VOCAB = 20
EMB = 16
HIDDEN = 32              # bidirectional => per-direction hidden = HIDDEN // 2
H_HALF = HIDDEN // 2
TAGS = 5                 # len(tag_to_ix)


def bilstm_kernel(x2_ref,                 # (L*B, 2E)  rows t*B+b: [emb(t) | emb(L-1-t)]
                  wx2_ref, bx_ref,        # (2E, 8Hh), (1, 8Hh)   gate cols (i_f,i_b,f_f,f_b,o_f,o_b,g_f,g_b)
                  whh_ref,                # (2Hh, 8Hh) block-diagonal per direction
                  h0_ref, c0_ref,         # (B, 2Hh) combined [fwd | bwd]
                  wtag_ref, btag_ref,     # (2Hh, T), (1, T)
                  scores_ref,             # out (L*B, 1) f32
                  paths_ref,              # out (L*B, 1) i32
                  out_ref):               # scratch (L*B, 2Hh) f32
    L = SEQ_LEN
    B = BATCH
    Hh = H_HALF
    H2 = 2 * Hh

    # ---- (1) hoisted input projection: ONE matmul, bias folded in ----------
    # Backward-direction columns already see the time-reversed input, so each
    # recurrence step reads a single contiguous (B, 8Hh) row group.
    gx = (jnp.dot(x2_ref[...], wx2_ref[...], preferred_element_type=jnp.float32)
          + bx_ref[...])                                        # (L*B, 8Hh)

    # ---- (2) fused bidirectional recurrence, statically unrolled -----------
    whh = whh_ref[...]                                          # (2Hh, 8Hh)
    h = h0_ref[...]                                             # (B, 2Hh) = [h_f | h_b]
    c = c0_ref[...]
    hs = []
    for s in range(L):
        # one recurrent MXU dot per step (both directions)
        g = (jnp.dot(h, whh, preferred_element_type=jnp.float32)
             + gx[s * B:(s + 1) * B, :])                        # (B, 8Hh)
        sig = jax.nn.sigmoid(g[:, 0:3 * H2])                    # lanes 0:96  = i|f|o (both dirs)
        gg = jnp.tanh(g[:, 3 * H2:4 * H2])                      # lanes 96:128 = g (both dirs)
        c = sig[:, H2:2 * H2] * c + sig[:, 0:H2] * gg           # f*c + i*g
        h = sig[:, 2 * H2:3 * H2] * jnp.tanh(c)                 # o*tanh(c)
        hs.append(h)                                            # fwd@t=s, bwd@t=L-1-s

    # ---- (3) pair fwd(t) with bwd(t) (lane select), one tag matmul ---------
    lane = lax.broadcasted_iota(jnp.int32, (B, H2), 1)
    for t in range(L):
        out_ref[t * B:(t + 1) * B, :] = jnp.where(lane < Hh, hs[t], hs[L - 1 - t])

    feats = (jnp.dot(out_ref[...], wtag_ref[...], preferred_element_type=jnp.float32)
             + btag_ref[...])                                   # (L*B, T)

    max_val = jnp.max(feats, axis=-1, keepdims=True)            # (L*B, 1)
    scores_ref[...] = max_val
    idx = lax.broadcasted_iota(jnp.int32, feats.shape, 1)
    is_max = feats == max_val
    # first index achieving the max (matches torch.max / jnp.argmax semantics)
    paths_ref[...] = jnp.min(jnp.where(is_max, idx, TAGS),
                             axis=-1, keepdims=True).astype(jnp.int32)


def init_params(key):
    ks = jax.random.split(key, 8)
    s = 0.1

    def lstm_dir(k):
        k1, k2, k3, k4 = jax.random.split(k, 4)
        w_ih = jax.random.normal(k1, (4 * H_HALF, EMB), jnp.float32) * s
        w_hh = jax.random.normal(k2, (4 * H_HALF, H_HALF), jnp.float32) * s
        b_ih = jax.random.normal(k3, (4 * H_HALF,), jnp.float32) * s
        b_hh = jax.random.normal(k4, (4 * H_HALF,), jnp.float32) * s
        return w_ih, w_hh, b_ih, b_hh

    params = dict(
        emb=jax.random.normal(ks[0], (VOCAB, EMB), jnp.float32) * s,
        fwd=lstm_dir(ks[1]),
        bwd=lstm_dir(ks[2]),
        w_tag=jax.random.normal(ks[3], (TAGS, HIDDEN), jnp.float32) * s,
        b_tag=jax.random.normal(ks[4], (TAGS,), jnp.float32) * s,
        h0=jax.random.normal(ks[5], (2, BATCH, H_HALF), jnp.float32),
        c0=jax.random.normal(ks[6], (2, BATCH, H_HALF), jnp.float32),
    )
    return params


def _prep_fused_weights(params):
    """Build fused, gate-reordered weights for the kernel (all XLA-side, one-time)."""
    Hh = H_HALF

    def split_gates(w):  # PyTorch gate-row order (i, f, g, o)
        return jnp.split(w, 4, axis=0)

    w_ih_f, w_hh_f, b_ih_f, b_hh_f = params["fwd"]
    w_ih_b, w_hh_b, b_ih_b, b_hh_b = params["bwd"]

    i_f, f_f, g_f, o_f = split_gates(w_ih_f)        # (Hh, E) each
    i_b, f_b, g_b, o_b = split_gates(w_ih_b)
    zE = jnp.zeros((EMB, Hh), jnp.float32)
    # rows 0:E act on x(t) (forward dir), rows E:2E act on x(L-1-t) (backward dir)
    wx2_top = jnp.concatenate([i_f.T, zE, f_f.T, zE, o_f.T, zE, g_f.T, zE], axis=1)
    wx2_bot = jnp.concatenate([zE, i_b.T, zE, f_b.T, zE, o_b.T, zE, g_b.T], axis=1)
    wx2 = jnp.concatenate([wx2_top, wx2_bot], axis=0)           # (2E, 8Hh) = (32, 128)

    bsum_f = b_ih_f + b_hh_f
    bsum_b = b_ih_b + b_hh_b
    bi_f, bf_f, bg_f, bo_f = jnp.split(bsum_f, 4)
    bi_b, bf_b, bg_b, bo_b = jnp.split(bsum_b, 4)
    bx = jnp.concatenate([bi_f, bi_b, bf_f, bf_b,
                          bo_f, bo_b, bg_f, bg_b]).reshape(1, -1)   # (1, 128)

    ri_f, rf_f, rg_f, ro_f = split_gates(w_hh_f)    # (Hh, Hh) each
    ri_b, rf_b, rg_b, ro_b = split_gates(w_hh_b)
    zH = jnp.zeros((Hh, Hh), jnp.float32)
    whh_top = jnp.concatenate([ri_f.T, zH, rf_f.T, zH, ro_f.T, zH, rg_f.T, zH], axis=1)
    whh_bot = jnp.concatenate([zH, ri_b.T, zH, rf_b.T, zH, ro_b.T, zH, rg_b.T], axis=1)
    whh_blk = jnp.concatenate([whh_top, whh_bot], axis=0)       # (2Hh, 8Hh) = (32, 128)

    h0c = jnp.concatenate([params["h0"][0], params["h0"][1]], axis=-1)   # (B, 2Hh)
    c0c = jnp.concatenate([params["c0"][0], params["c0"][1]], axis=-1)   # (B, 2Hh)

    wtag_t = params["w_tag"].T                                   # (2Hh, T) rows: [fwd | bwd]
    btag = params["b_tag"].reshape(1, -1)                        # (1, T)
    return wx2, bx, whh_blk, h0c, c0c, wtag_t, btag


def bilstm_forward(sentences, params):
    """sentences: (B, L) int32 token ids. Returns (scores (B,L) f32, paths (B,L) i32)."""
    # glue: embedding lookup + layout transforms (all cheap, XLA-side)
    emb = jnp.take(params["emb"], sentences, axis=0).astype(jnp.float32)   # (B, L, E)
    x_lbe = jnp.transpose(emb, (1, 0, 2))                                  # (L, B, E) time-major
    x_fwd = x_lbe.reshape(SEQ_LEN * BATCH, EMB)
    x_bwd = x_lbe[::-1].reshape(SEQ_LEN * BATCH, EMB)                      # time-reversed rows
    x2 = jnp.concatenate([x_fwd, x_bwd], axis=1)                           # (L*B, 2E)

    wx2, bx, whh_blk, h0c, c0c, wtag_t, btag = _prep_fused_weights(params)

    vmem = pl.BlockSpec(memory_space=pltpu.MemorySpace.VMEM)
    scores_flat, paths_flat = pl.pallas_call(
        bilstm_kernel,
        out_shape=(jax.ShapeDtypeStruct((SEQ_LEN * BATCH, 1), jnp.float32),
                   jax.ShapeDtypeStruct((SEQ_LEN * BATCH, 1), jnp.int32)),
        in_specs=[vmem] * 8,
        out_specs=(vmem, vmem),
        scratch_shapes=[
            pltpu.VMEM((SEQ_LEN * BATCH, 2 * H_HALF), jnp.float32),  # paired lstm outputs
        ],
    )(x2, wx2, bx, whh_blk, h0c, c0c, wtag_t, btag)

    scores = scores_flat.reshape(SEQ_LEN, BATCH).T                         # (B, L)
    paths = paths_flat.reshape(SEQ_LEN, BATCH).T                           # (B, L)
    return scores, paths


def bilstm_forward_ref(sentences, params):
    """Pure-JAX reference mirroring the PyTorch forward semantics."""
    emb = jnp.take(params["emb"], sentences, axis=0)              # (B, L, E)

    def run_dir(w_ih, w_hh, b_ih, b_hh, h0, c0, xs):
        def step(carry, x_t):
            h, c = carry
            g = x_t @ w_ih.T + b_ih + h @ w_hh.T + b_hh
            i, f, gg, o = jnp.split(g, 4, axis=-1)
            c_new = jax.nn.sigmoid(f) * c + jax.nn.sigmoid(i) * jnp.tanh(gg)
            h_new = jax.nn.sigmoid(o) * jnp.tanh(c_new)
            return (h_new, c_new), h_new
        _, hs = lax.scan(step, (h0, c0), xs)
        return hs                                                 # (L, B, Hh)

    x_lbe = jnp.transpose(emb, (1, 0, 2))
    hs_f = run_dir(*params["fwd"], params["h0"][0], params["c0"][0], x_lbe)
    hs_b = run_dir(*params["bwd"], params["h0"][1], params["c0"][1], x_lbe[::-1])[::-1]
    lstm_out = jnp.concatenate([hs_f, hs_b], axis=-1)             # (L, B, H)
    feats = lstm_out @ params["w_tag"].T + params["b_tag"]        # (L, B, T)
    return jnp.max(feats, -1).T, jnp.argmax(feats, -1).T.astype(jnp.int32)


if __name__ == "__main__":
    key = jax.random.PRNGKey(0)
    k_param, k_sent = jax.random.split(key)
    params = init_params(k_param)
    sentences = jax.random.randint(k_sent, (BATCH, SEQ_LEN), 0, VOCAB, dtype=jnp.int32)

    scores, paths = bilstm_forward(sentences, params)
    jax.block_until_ready((scores, paths))

    # correctness check against pure-JAX reference
    scores_ref, paths_ref = bilstm_forward_ref(sentences, params)
    assert jnp.allclose(scores, scores_ref, atol=1e-4), "score mismatch"
    assert jnp.array_equal(paths, paths_ref), "path mismatch"

    # mirror the module's per-sentence (score, path) lists (lengths default to L)
    lengths = [SEQ_LEN] * BATCH
    out_scores = [scores[b, :lengths[b]] for b in range(BATCH)]
    out_paths = [paths[b, :lengths[b]].tolist() for b in range(BATCH)]
    _ = (out_scores, out_paths)

    print("KERNEL_OK")
</pallas_src>

<mosaic_0001>
module attributes {stable_mosaic.version = 11 : i64} {
  func.func @bilstm_kernel(%arg0: memref<16x32xf32, #tpu.memory_space<vmem>>, %arg1: memref<32x128xf32, #tpu.memory_space<vmem>>, %arg2: memref<1x128xf32, #tpu.memory_space<vmem>>, %arg3: memref<32x128xf32, #tpu.memory_space<vmem>>, %arg4: memref<2x32xf32, #tpu.memory_space<vmem>>, %arg5: memref<2x32xf32, #tpu.memory_space<vmem>>, %arg6: memref<32x5xf32, #tpu.memory_space<vmem>>, %arg7: memref<1x5xf32, #tpu.memory_space<vmem>>, %arg8: memref<16x1xf32, #tpu.memory_space<vmem>>, %arg9: memref<16x1xi32, #tpu.memory_space<vmem>>, %arg10: memref<16x32xf32, #tpu.memory_space<vmem>>) attributes {dimension_semantics = [], scalar_prefetch = 0 : i64, scratch_operands = 1 : i64, tpu.core_type = #tpu.core_type<tc>} {
    %c0 = arith.constant 0 : index
    %c0_0 = arith.constant 0 : index
    %0 = vector.load %arg0[%c0, %c0_0] : memref<16x32xf32, #tpu.memory_space<vmem>>, vector<16x32xf32>
    %c0_1 = arith.constant 0 : index
    %c0_2 = arith.constant 0 : index
    %1 = vector.load %arg1[%c0_1, %c0_2] : memref<32x128xf32, #tpu.memory_space<vmem>>, vector<32x128xf32>
    %cst = arith.constant dense<0.000000e+00> : vector<16x128xf32>
    %2 = tpu.matmul %0, %1, %cst {dimension_numbers = #tpu.dot_dimension_numbers<[1], [0], [0], [1], [0, 0, 1, 1], [], []>} : vector<16x32xf32>, vector<32x128xf32>, vector<16x128xf32> -> vector<16x128xf32>
    %c0_3 = arith.constant 0 : index
    %c0_4 = arith.constant 0 : index
    %3 = vector.load %arg2[%c0_3, %c0_4] : memref<1x128xf32, #tpu.memory_space<vmem>>, vector<1x128xf32>
    %4 = vector.broadcast %3 : vector<1x128xf32> to vector<16x128xf32>
    %5 = arith.addf %2, %4 : vector<16x128xf32>
    %c0_5 = arith.constant 0 : index
    %c0_6 = arith.constant 0 : index
    %6 = vector.load %arg3[%c0_5, %c0_6] : memref<32x128xf32, #tpu.memory_space<vmem>>, vector<32x128xf32>
    %c0_7 = arith.constant 0 : index
    %c0_8 = arith.constant 0 : index
    %7 = vector.load %arg4[%c0_7, %c0_8] : memref<2x32xf32, #tpu.memory_space<vmem>>, vector<2x32xf32>
    %c0_9 = arith.constant 0 : index
    %c0_10 = arith.constant 0 : index
    %8 = vector.load %arg5[%c0_9, %c0_10] : memref<2x32xf32, #tpu.memory_space<vmem>>, vector<2x32xf32>
    %cst_11 = arith.constant dense<0.000000e+00> : vector<2x128xf32>
    %9 = tpu.matmul %7, %6, %cst_11 {dimension_numbers = #tpu.dot_dimension_numbers<[1], [0], [0], [1], [0, 0, 1, 1], [], []>} : vector<2x32xf32>, vector<32x128xf32>, vector<2x128xf32> -> vector<2x128xf32>
    %10 = vector.extract_strided_slice %5 {offsets = [0, 0], sizes = [2, 128], strides = [1, 1]} : vector<16x128xf32> to vector<2x128xf32>
    %11 = arith.addf %9, %10 : vector<2x128xf32>
    %12 = vector.extract_strided_slice %11 {offsets = [0, 0], sizes = [2, 96], strides = [1, 1]} : vector<2x128xf32> to vector<2x96xf32>
    %13 = arith.negf %12 : vector<2x96xf32>
    %14 = math.exp %13 : vector<2x96xf32>
    %cst_12 = arith.constant 1.000000e+00 : f32
    %15 = vector.broadcast %cst_12 : f32 to vector<2x96xf32>
    %16 = arith.addf %15, %14 : vector<2x96xf32>
    %17 = arith.divf %15, %16 : vector<2x96xf32>
    %18 = vector.extract_strided_slice %11 {offsets = [0, 96], sizes = [2, 32], strides = [1, 1]} : vector<2x128xf32> to vector<2x32xf32>
    %19 = math.tanh %18 : vector<2x32xf32>
    %20 = vector.extract_strided_slice %17 {offsets = [0, 32], sizes = [2, 32], strides = [1, 1]} : vector<2x96xf32> to vector<2x32xf32>
    %21 = arith.mulf %20, %8 : vector<2x32xf32>
    %22 = vector.extract_strided_slice %17 {offsets = [0, 0], sizes = [2, 32], strides = [1, 1]} : vector<2x96xf32> to vector<2x32xf32>
    %23 = arith.mulf %22, %19 : vector<2x32xf32>
    %24 = arith.addf %21, %23 : vector<2x32xf32>
    %25 = vector.extract_strided_slice %17 {offsets = [0, 64], sizes = [2, 32], strides = [1, 1]} : vector<2x96xf32> to vector<2x32xf32>
    %26 = math.tanh %24 : vector<2x32xf32>
    %27 = arith.mulf %25, %26 : vector<2x32xf32>
    %cst_13 = arith.constant dense<0.000000e+00> : vector<2x128xf32>
    %28 = tpu.matmul %27, %6, %cst_13 {dimension_numbers = #tpu.dot_dimension_numbers<[1], [0], [0], [1], [0, 0, 1, 1], [], []>} : vector<2x32xf32>, vector<32x128xf32>, vector<2x128xf32> -> vector<2x128xf32>
    %29 = vector.extract_strided_slice %5 {offsets = [2, 0], sizes = [2, 128], strides = [1, 1]} : vector<16x128xf32> to vector<2x128xf32>
    %30 = arith.addf %28, %29 : vector<2x128xf32>
    %31 = vector.extract_strided_slice %30 {offsets = [0, 0], sizes = [2, 96], strides = [1, 1]} : vector<2x128xf32> to vector<2x96xf32>
    %32 = arith.negf %31 : vector<2x96xf32>
    %33 = math.exp %32 : vector<2x96xf32>
    %cst_14 = arith.constant 1.000000e+00 : f32
    %34 = vector.broadcast %cst_14 : f32 to vector<2x96xf32>
    %35 = arith.addf %34, %33 : vector<2x96xf32>
    %36 = arith.divf %34, %35 : vector<2x96xf32>
    %37 = vector.extract_strided_slice %30 {offsets = [0, 96], sizes = [2, 32], strides = [1, 1]} : vector<2x128xf32> to vector<2x32xf32>
    %38 = math.tanh %37 : vector<2x32xf32>
    %39 = vector.extract_strided_slice %36 {offsets = [0, 32], sizes = [2, 32], strides = [1, 1]} : vector<2x96xf32> to vector<2x32xf32>
    %40 = arith.mulf %39, %24 : vector<2x32xf32>
    %41 = vector.extract_strided_slice %36 {offsets = [0, 0], sizes = [2, 32], strides = [1, 1]} : vector<2x96xf32> to vector<2x32xf32>
    %42 = arith.mulf %41, %38 : vector<2x32xf32>
    %43 = arith.addf %40, %42 : vector<2x32xf32>
    %44 = vector.extract_strided_slice %36 {offsets = [0, 64], sizes = [2, 32], strides = [1, 1]} : vector<2x96xf32> to vector<2x32xf32>
    %45 = math.tanh %43 : vector<2x32xf32>
    %46 = arith.mulf %44, %45 : vector<2x32xf32>
    %cst_15 = arith.constant dense<0.000000e+00> : vector<2x128xf32>
    %47 = tpu.matmul %46, %6, %cst_15 {dimension_numbers = #tpu.dot_dimension_numbers<[1], [0], [0], [1], [0, 0, 1, 1], [], []>} : vector<2x32xf32>, vector<32x128xf32>, vector<2x128xf32> -> vector<2x128xf32>
    %48 = vector.extract_strided_slice %5 {offsets = [4, 0], sizes = [2, 128], strides = [1, 1]} : vector<16x128xf32> to vector<2x128xf32>
    %49 = arith.addf %47, %48 : vector<2x128xf32>
    %50 = vector.extract_strided_slice %49 {offsets = [0, 0], sizes = [2, 96], strides = [1, 1]} : vector<2x128xf32> to vector<2x96xf32>
    %51 = arith.negf %50 : vector<2x96xf32>
    %52 = math.exp %51 : vector<2x96xf32>
    %cst_16 = arith.constant 1.000000e+00 : f32
    %53 = vector.broadcast %cst_16 : f32 to vector<2x96xf32>
    %54 = arith.addf %53, %52 : vector<2x96xf32>
    %55 = arith.divf %53, %54 : vector<2x96xf32>
    %56 = vector.extract_strided_slice %49 {offsets = [0, 96], sizes = [2, 32], strides = [1, 1]} : vector<2x128xf32> to vector<2x32xf32>
    %57 = math.tanh %56 : vector<2x32xf32>
    %58 = vector.extract_strided_slice %55 {offsets = [0, 32], sizes = [2, 32], strides = [1, 1]} : vector<2x96xf32> to vector<2x32xf32>
    %59 = arith.mulf %58, %43 : vector<2x32xf32>
    %60 = vector.extract_strided_slice %55 {offsets = [0, 0], sizes = [2, 32], strides = [1, 1]} : vector<2x96xf32> to vector<2x32xf32>
    %61 = arith.mulf %60, %57 : vector<2x32xf32>
    %62 = arith.addf %59, %61 : vector<2x32xf32>
    %63 = vector.extract_strided_slice %55 {offsets = [0, 64], sizes = [2, 32], strides = [1, 1]} : vector<2x96xf32> to vector<2x32xf32>
    %64 = math.tanh %62 : vector<2x32xf32>
    %65 = arith.mulf %63, %64 : vector<2x32xf32>
    %cst_17 = arith.constant dense<0.000000e+00> : vector<2x128xf32>
    %66 = tpu.matmul %65, %6, %cst_17 {dimension_numbers = #tpu.dot_dimension_numbers<[1], [0], [0], [1], [0, 0, 1, 1], [], []>} : vector<2x32xf32>, vector<32x128xf32>, vector<2x128xf32> -> vector<2x128xf32>
    %67 = vector.extract_strided_slice %5 {offsets = [6, 0], sizes = [2, 128], strides = [1, 1]} : vector<16x128xf32> to vector<2x128xf32>
    %68 = arith.addf %66, %67 : vector<2x128xf32>
    %69 = vector.extract_strided_slice %68 {offsets = [0, 0], sizes = [2, 96], strides = [1, 1]} : vector<2x128xf32> to vector<2x96xf32>
    %70 = arith.negf %69 : vector<2x96xf32>
    %71 = math.exp %70 : vector<2x96xf32>
    %cst_18 = arith.constant 1.000000e+00 : f32
    %72 = vector.broadcast %cst_18 : f32 to vector<2x96xf32>
    %73 = arith.addf %72, %71 : vector<2x96xf32>
    %74 = arith.divf %72, %73 : vector<2x96xf32>
    %75 = vector.extract_strided_slice %68 {offsets = [0, 96], sizes = [2, 32], strides = [1, 1]} : vector<2x128xf32> to vector<2x32xf32>
    %76 = math.tanh %75 : vector<2x32xf32>
    %77 = vector.extract_strided_slice %74 {offsets = [0, 32], sizes = [2, 32], strides = [1, 1]} : vector<2x96xf32> to vector<2x32xf32>
    %78 = arith.mulf %77, %62 : vector<2x32xf32>
    %79 = vector.extract_strided_slice %74 {offsets = [0, 0], sizes = [2, 32], strides = [1, 1]} : vector<2x96xf32> to vector<2x32xf32>
    %80 = arith.mulf %79, %76 : vector<2x32xf32>
    %81 = arith.addf %78, %80 : vector<2x32xf32>
    %82 = vector.extract_strided_slice %74 {offsets = [0, 64], sizes = [2, 32], strides = [1, 1]} : vector<2x96xf32> to vector<2x32xf32>
    %83 = math.tanh %81 : vector<2x32xf32>
    %84 = arith.mulf %82, %83 : vector<2x32xf32>
    %cst_19 = arith.constant dense<0.000000e+00> : vector<2x128xf32>
    %85 = tpu.matmul %84, %6, %cst_19 {dimension_numbers = #tpu.dot_dimension_numbers<[1], [0], [0], [1], [0, 0, 1, 1], [], []>} : vector<2x32xf32>, vector<32x128xf32>, vector<2x128xf32> -> vector<2x128xf32>
    %86 = vector.extract_strided_slice %5 {offsets = [8, 0], sizes = [2, 128], strides = [1, 1]} : vector<16x128xf32> to vector<2x128xf32>
    %87 = arith.addf %85, %86 : vector<2x128xf32>
    %88 = vector.extract_strided_slice %87 {offsets = [0, 0], sizes = [2, 96], strides = [1, 1]} : vector<2x128xf32> to vector<2x96xf32>
    %89 = arith.negf %88 : vector<2x96xf32>
    %90 = math.exp %89 : vector<2x96xf32>
    %cst_20 = arith.constant 1.000000e+00 : f32
    %91 = vector.broadcast %cst_20 : f32 to vector<2x96xf32>
    %92 = arith.addf %91, %90 : vector<2x96xf32>
    %93 = arith.divf %91, %92 : vector<2x96xf32>
    %94 = vector.extract_strided_slice %87 {offsets = [0, 96], sizes = [2, 32], strides = [1, 1]} : vector<2x128xf32> to vector<2x32xf32>
    %95 = math.tanh %94 : vector<2x32xf32>
    %96 = vector.extract_strided_slice %93 {offsets = [0, 32], sizes = [2, 32], strides = [1, 1]} : vector<2x96xf32> to vector<2x32xf32>
    %97 = arith.mulf %96, %81 : vector<2x32xf32>
    %98 = vector.extract_strided_slice %93 {offsets = [0, 0], sizes = [2, 32], strides = [1, 1]} : vector<2x96xf32> to vector<2x32xf32>
    %99 = arith.mulf %98, %95 : vector<2x32xf32>
    %100 = arith.addf %97, %99 : vector<2x32xf32>
    %101 = vector.extract_strided_slice %93 {offsets = [0, 64], sizes = [2, 32], strides = [1, 1]} : vector<2x96xf32> to vector<2x32xf32>
    %102 = math.tanh %100 : vector<2x32xf32>
    %103 = arith.mulf %101, %102 : vector<2x32xf32>
    %cst_21 = arith.constant dense<0.000000e+00> : vector<2x128xf32>
    %104 = tpu.matmul %103, %6, %cst_21 {dimension_numbers = #tpu.dot_dimension_numbers<[1], [0], [0], [1], [0, 0, 1, 1], [], []>} : vector<2x32xf32>, vector<32x128xf32>, vector<2x128xf32> -> vector<2x128xf32>
    %105 = vector.extract_strided_slice %5 {offsets = [10, 0], sizes = [2, 128], strides = [1, 1]} : vector<16x128xf32> to vector<2x128xf32>
    %106 = arith.addf %104, %105 : vector<2x128xf32>
    %107 = vector.extract_strided_slice %106 {offsets = [0, 0], sizes = [2, 96], strides = [1, 1]} : vector<2x128xf32> to vector<2x96xf32>
    %108 = arith.negf %107 : vector<2x96xf32>
    %109 = math.exp %108 : vector<2x96xf32>
    %cst_22 = arith.constant 1.000000e+00 : f32
    %110 = vector.broadcast %cst_22 : f32 to vector<2x96xf32>
    %111 = arith.addf %110, %109 : vector<2x96xf32>
    %112 = arith.divf %110, %111 : vector<2x96xf32>
    %113 = vector.extract_strided_slice %106 {offsets = [0, 96], sizes = [2, 32], strides = [1, 1]} : vector<2x128xf32> to vector<2x32xf32>
    %114 = math.tanh %113 : vector<2x32xf32>
    %115 = vector.extract_strided_slice %112 {offsets = [0, 32], sizes = [2, 32], strides = [1, 1]} : vector<2x96xf32> to vector<2x32xf32>
    %116 = arith.mulf %115, %100 : vector<2x32xf32>
    %117 = vector.extract_strided_slice %112 {offsets = [0, 0], sizes = [2, 32], strides = [1, 1]} : vector<2x96xf32> to vector<2x32xf32>
    %118 = arith.mulf %117, %114 : vector<2x32xf32>
    %119 = arith.addf %116, %118 : vector<2x32xf32>
    %120 = vector.extract_strided_slice %112 {offsets = [0, 64], sizes = [2, 32], strides = [1, 1]} : vector<2x96xf32> to vector<2x32xf32>
    %121 = math.tanh %119 : vector<2x32xf32>
    %122 = arith.mulf %120, %121 : vector<2x32xf32>
    %cst_23 = arith.constant dense<0.000000e+00> : vector<2x128xf32>
    %123 = tpu.matmul %122, %6, %cst_23 {dimension_numbers = #tpu.dot_dimension_numbers<[1], [0], [0], [1], [0, 0, 1, 1], [], []>} : vector<2x32xf32>, vector<32x128xf32>, vector<2x128xf32> -> vector<2x128xf32>
    %124 = vector.extract_strided_slice %5 {offsets = [12, 0], sizes = [2, 128], strides = [1, 1]} : vector<16x128xf32> to vector<2x128xf32>
    %125 = arith.addf %123, %124 : vector<2x128xf32>
    %126 = vector.extract_strided_slice %125 {offsets = [0, 0], sizes = [2, 96], strides = [1, 1]} : vector<2x128xf32> to vector<2x96xf32>
    %127 = arith.negf %126 : vector<2x96xf32>
    %128 = math.exp %127 : vector<2x96xf32>
    %cst_24 = arith.constant 1.000000e+00 : f32
    %129 = vector.broadcast %cst_24 : f32 to vector<2x96xf32>
    %130 = arith.addf %129, %128 : vector<2x96xf32>
    %131 = arith.divf %129, %130 : vector<2x96xf32>
    %132 = vector.extract_strided_slice %125 {offsets = [0, 96], sizes = [2, 32], strides = [1, 1]} : vector<2x128xf32> to vector<2x32xf32>
    %133 = math.tanh %132 : vector<2x32xf32>
    %134 = vector.extract_strided_slice %131 {offsets = [0, 32], sizes = [2, 32], strides = [1, 1]} : vector<2x96xf32> to vector<2x32xf32>
    %135 = arith.mulf %134, %119 : vector<2x32xf32>
    %136 = vector.extract_strided_slice %131 {offsets = [0, 0], sizes = [2, 32], strides = [1, 1]} : vector<2x96xf32> to vector<2x32xf32>
    %137 = arith.mulf %136, %133 : vector<2x32xf32>
    %138 = arith.addf %135, %137 : vector<2x32xf32>
    %139 = vector.extract_strided_slice %131 {offsets = [0, 64], sizes = [2, 32], strides = [1, 1]} : vector<2x96xf32> to vector<2x32xf32>
    %140 = math.tanh %138 : vector<2x32xf32>
    %141 = arith.mulf %139, %140 : vector<2x32xf32>
    %cst_25 = arith.constant dense<0.000000e+00> : vector<2x128xf32>
    %142 = tpu.matmul %141, %6, %cst_25 {dimension_numbers = #tpu.dot_dimension_numbers<[1], [0], [0], [1], [0, 0, 1, 1], [], []>} : vector<2x32xf32>, vector<32x128xf32>, vector<2x128xf32> -> vector<2x128xf32>
    %143 = vector.extract_strided_slice %5 {offsets = [14, 0], sizes = [2, 128], strides = [1, 1]} : vector<16x128xf32> to vector<2x128xf32>
    %144 = arith.addf %142, %143 : vector<2x128xf32>
    %145 = vector.extract_strided_slice %144 {offsets = [0, 0], sizes = [2, 96], strides = [1, 1]} : vector<2x128xf32> to vector<2x96xf32>
    %146 = arith.negf %145 : vector<2x96xf32>
    %147 = math.exp %146 : vector<2x96xf32>
    %cst_26 = arith.constant 1.000000e+00 : f32
    %148 = vector.broadcast %cst_26 : f32 to vector<2x96xf32>
    %149 = arith.addf %148, %147 : vector<2x96xf32>
    %150 = arith.divf %148, %149 : vector<2x96xf32>
    %151 = vector.extract_strided_slice %144 {offsets = [0, 96], sizes = [2, 32], strides = [1, 1]} : vector<2x128xf32> to vector<2x32xf32>
    %152 = math.tanh %151 : vector<2x32xf32>
    %153 = vector.extract_strided_slice %150 {offsets = [0, 32], sizes = [2, 32], strides = [1, 1]} : vector<2x96xf32> to vector<2x32xf32>
    %154 = arith.mulf %153, %138 : vector<2x32xf32>
    %155 = vector.extract_strided_slice %150 {offsets = [0, 0], sizes = [2, 32], strides = [1, 1]} : vector<2x96xf32> to vector<2x32xf32>
    %156 = arith.mulf %155, %152 : vector<2x32xf32>
    %157 = arith.addf %154, %156 : vector<2x32xf32>
    %158 = vector.extract_strided_slice %150 {offsets = [0, 64], sizes = [2, 32], strides = [1, 1]} : vector<2x96xf32> to vector<2x32xf32>
    %159 = math.tanh %157 : vector<2x32xf32>
    %160 = arith.mulf %158, %159 : vector<2x32xf32>
    %161 = tpu.iota {dimensions = array<i32: 1>} : vector<2x32xi32>
    %c16_i32 = arith.constant 16 : i32
    %162 = vector.broadcast %c16_i32 : i32 to vector<2x32xi32>
    %163 = arith.cmpi slt, %161, %162 : vector<2x32xi32>
    %164 = arith.select %163, %27, %160 : vector<2x32xi1>, vector<2x32xf32>
    %c0_27 = arith.constant 0 : index
    %c0_28 = arith.constant 0 : index
    %165 = vector.load %arg10[%c0_27, %c0_28] : memref<16x32xf32, #tpu.memory_space<vmem>>, vector<2x32xf32>
    tpu.vector_store %arg10[%c0_27, %c0_28], %164 {strides = array<i32>} : memref<16x32xf32, #tpu.memory_space<vmem>>, vector<2x32xf32>,
    %c16_i32_29 = arith.constant 16 : i32
    %166 = vector.broadcast %c16_i32_29 : i32 to vector<2x32xi32>
    %167 = arith.cmpi slt, %161, %166 : vector<2x32xi32>
    %168 = arith.select %167, %46, %141 : vector<2x32xi1>, vector<2x32xf32>
    %c2 = arith.constant 2 : index
    %c0_30 = arith.constant 0 : index
    %169 = vector.load %arg10[%c2, %c0_30] : memref<16x32xf32, #tpu.memory_space<vmem>>, vector<2x32xf32>
    tpu.vector_store %arg10[%c2, %c0_30], %168 {strides = array<i32>} : memref<16x32xf32, #tpu.memory_space<vmem>>, vector<2x32xf32>,
    %c16_i32_31 = arith.constant 16 : i32
    %170 = vector.broadcast %c16_i32_31 : i32 to vector<2x32xi32>
    %171 = arith.cmpi slt, %161, %170 : vector<2x32xi32>
    %172 = arith.select %171, %65, %122 : vector<2x32xi1>, vector<2x32xf32>
    %c4 = arith.constant 4 : index
    %c0_32 = arith.constant 0 : index
    %173 = vector.load %arg10[%c4, %c0_32] : memref<16x32xf32, #tpu.memory_space<vmem>>, vector<2x32xf32>
    tpu.vector_store %arg10[%c4, %c0_32], %172 {strides = array<i32>} : memref<16x32xf32, #tpu.memory_space<vmem>>, vector<2x32xf32>,
    %c16_i32_33 = arith.constant 16 : i32
    %174 = vector.broadcast %c16_i32_33 : i32 to vector<2x32xi32>
    %175 = arith.cmpi slt, %161, %174 : vector<2x32xi32>
    %176 = arith.select %175, %84, %103 : vector<2x32xi1>, vector<2x32xf32>
    %c6 = arith.constant 6 : index
    %c0_34 = arith.constant 0 : index
    %177 = vector.load %arg10[%c6, %c0_34] : memref<16x32xf32, #tpu.memory_space<vmem>>, vector<2x32xf32>
    tpu.vector_store %arg10[%c6, %c0_34], %176 {strides = array<i32>} : memref<16x32xf32, #tpu.memory_space<vmem>>, vector<2x32xf32>,
    %c16_i32_35 = arith.constant 16 : i32
    %178 = vector.broadcast %c16_i32_35 : i32 to vector<2x32xi32>
    %179 = arith.cmpi slt, %161, %178 : vector<2x32xi32>
    %180 = arith.select %179, %103, %84 : vector<2x32xi1>, vector<2x32xf32>
    %c8 = arith.constant 8 : index
    %c0_36 = arith.constant 0 : index
    %181 = vector.load %arg10[%c8, %c0_36] : memref<16x32xf32, #tpu.memory_space<vmem>>, vector<2x32xf32>
    tpu.vector_store %arg10[%c8, %c0_36], %180 {strides = array<i32>} : memref<16x32xf32, #tpu.memory_space<vmem>>, vector<2x32xf32>,
    %c16_i32_37 = arith.constant 16 : i32
    %182 = vector.broadcast %c16_i32_37 : i32 to vector<2x32xi32>
    %183 = arith.cmpi slt, %161, %182 : vector<2x32xi32>
    %184 = arith.select %183, %122, %65 : vector<2x32xi1>, vector<2x32xf32>
    %c10 = arith.constant 10 : index
    %c0_38 = arith.constant 0 : index
    %185 = vector.load %arg10[%c10, %c0_38] : memref<16x32xf32, #tpu.memory_space<vmem>>, vector<2x32xf32>
    tpu.vector_store %arg10[%c10, %c0_38], %184 {strides = array<i32>} : memref<16x32xf32, #tpu.memory_space<vmem>>, vector<2x32xf32>,
    %c16_i32_39 = arith.constant 16 : i32
    %186 = vector.broadcast %c16_i32_39 : i32 to vector<2x32xi32>
    %187 = arith.cmpi slt, %161, %186 : vector<2x32xi32>
    %188 = arith.select %187, %141, %46 : vector<2x32xi1>, vector<2x32xf32>
    %c12 = arith.constant 12 : index
    %c0_40 = arith.constant 0 : index
    %189 = vector.load %arg10[%c12, %c0_40] : memref<16x32xf32, #tpu.memory_space<vmem>>, vector<2x32xf32>
    tpu.vector_store %arg10[%c12, %c0_40], %188 {strides = array<i32>} : memref<16x32xf32, #tpu.memory_space<vmem>>, vector<2x32xf32>,
    %c16_i32_41 = arith.constant 16 : i32
    %190 = vector.broadcast %c16_i32_41 : i32 to vector<2x32xi32>
    %191 = arith.cmpi slt, %161, %190 : vector<2x32xi32>
    %192 = arith.select %191, %160, %27 : vector<2x32xi1>, vector<2x32xf32>
    %c14 = arith.constant 14 : index
    %c0_42 = arith.constant 0 : index
    %193 = vector.load %arg10[%c14, %c0_42] : memref<16x32xf32, #tpu.memory_space<vmem>>, vector<2x32xf32>
    tpu.vector_store %arg10[%c14, %c0_42], %192 {strides = array<i32>} : memref<16x32xf32, #tpu.memory_space<vmem>>, vector<2x32xf32>,
    %c0_43 = arith.constant 0 : index
    %c0_44 = arith.constant 0 : index
    %194 = vector.load %arg10[%c0_43, %c0_44] : memref<16x32xf32, #tpu.memory_space<vmem>>, vector<16x32xf32>
    %c0_45 = arith.constant 0 : index
    %c0_46 = arith.constant 0 : index
    %195 = vector.load %arg6[%c0_45, %c0_46] : memref<32x5xf32, #tpu.memory_space<vmem>>, vector<32x5xf32>
    %cst_47 = arith.constant dense<0.000000e+00> : vector<16x5xf32>
    %196 = tpu.matmul %194, %195, %cst_47 {dimension_numbers = #tpu.dot_dimension_numbers<[1], [0], [0], [1], [0, 0, 1, 1], [], []>} : vector<16x32xf32>, vector<32x5xf32>, vector<16x5xf32> -> vector<16x5xf32>
    %c0_48 = arith.constant 0 : index
    %c0_49 = arith.constant 0 : index
    %197 = vector.load %arg7[%c0_48, %c0_49] : memref<1x5xf32, #tpu.memory_space<vmem>>, vector<1x5xf32>
    %198 = vector.broadcast %197 : vector<1x5xf32> to vector<16x5xf32>
    %199 = arith.addf %196, %198 : vector<16x5xf32>
    %cst_50 = arith.constant dense<0xFF800000> : vector<16xf32>
    %200 = vector.multi_reduction <maximumf>, %199, %cst_50 [1] : vector<16x5xf32> to vector<16xf32>
    %201 = vector.shape_cast %200 : vector<16xf32> to vector<16x1xf32>
    %c0_51 = arith.constant 0 : index
    %c0_52 = arith.constant 0 : index
    %202 = vector.load %arg8[%c0_51, %c0_52] : memref<16x1xf32, #tpu.memory_space<vmem>>, vector<16x1xf32>
    tpu.vector_store %arg8[%c0_51, %c0_52], %201 {strides = array<i32>} : memref<16x1xf32, #tpu.memory_space<vmem>>, vector<16x1xf32>,
    %203 = tpu.iota {dimensions = array<i32: 1>} : vector<16x5xi32>
    %204 = vector.broadcast %201 : vector<16x1xf32> to vector<16x5xf32>
    %205 = arith.cmpf oeq, %199, %204 : vector<16x5xf32>
    %c5_i32 = arith.constant 5 : i32
    %206 = vector.broadcast %c5_i32 : i32 to vector<16x5xi32>
    %207 = arith.select %205, %203, %206 : vector<16x5xi1>, vector<16x5xi32>
    %cst_53 = arith.constant dense<2147483647> : vector<16xi32>
    %208 = vector.multi_reduction <minsi>, %207, %cst_53 [1] : vector<16x5xi32> to vector<16xi32>
    %209 = vector.shape_cast %208 : vector<16xi32> to vector<16x1xi32>
    %c0_54 = arith.constant 0 : index
    %c0_55 = arith.constant 0 : index
    %210 = vector.load %arg9[%c0_54, %c0_55] : memref<16x1xi32, #tpu.memory_space<vmem>>, vector<16x1xi32>
    tpu.vector_store %arg9[%c0_54, %c0_55], %209 {strides = array<i32>} : memref<16x1xi32, #tpu.memory_space<vmem>>, vector<16x1xi32>,
    return
  }
}

</mosaic_0001>

<llo_original>
// kernel: tpu_custom_call.1
$region0: #{tpu_custom_call.1}
  #allocation0 [shape = 'u32[]', space=smem, size = 0x4, offset = 0x4, fixed_abs, tag = 'smem constant byte address 0x4 - core index']
  #allocation1 [shape = 'u32[144,128]{1,0:T(1,128)}', space=vmem, size = 0x12000, scoped, tag = 'internal scratch']
  #allocation2 [shape = 'f32[16,32]{1,0:T(8,128)}', space=vmem, size = 0x2000, scoped, tag = 'scratch operand']
  %s0 = inlined_call_operand.hbm [shape: f32[16,32], index: 0, kind: input, shape index: {}]
  %s1 = inlined_call_operand.vmem [shape: f32[32,128], index: 1, kind: input, shape index: {}]
  %s2 = inlined_call_operand.vmem [shape: f32[1,128], index: 2, kind: input, shape index: {}]
  %s3 = inlined_call_operand.hbm [shape: f32[32,128], index: 3, kind: input, shape index: {}]
  %s4 = inlined_call_operand.vmem [shape: f32[2,32], index: 4, kind: input, shape index: {}]
  %s5 = inlined_call_operand.vmem [shape: f32[2,32], index: 5, kind: input, shape index: {}]
  %s6 = inlined_call_operand.vmem [shape: f32[32,5], index: 6, kind: input, shape index: {}]
  %s7 = inlined_call_operand.vmem [shape: f32[1,5], index: 7, kind: input, shape index: {}]
  %s8 = inlined_call_operand.vmem [shape: f32[16,1], index: 8, kind: output, shape index: {0}]
  %s9 = inlined_call_operand.vmem [shape: s32[16,1], index: 9, kind: output, shape index: {1}]
  %10 = xla_tuple %s8, %s9
  %s11 = sld [smem:[#allocation0]]
  $region58: #{tpu_custom_call.1} parent=0
    _
  %s13 = ssub.s32 1, %s11
  %s14 = scalar_select 0, %s13, %s11
  $region1: #{tpu_custom_call.1} parent=0
    #allocation3 [shape = 'u8[8192]{0}', space=vmem, size = 0x2000, scoped, tag = 'input window, operand 0, single buffered']
    #allocation4 [shape = 's32[1]{0}', space=sflag, size = 0x4, scoped, tag = 'scoped memory for tpu_custom_call.1']
    #allocation5 [shape = 'u8[16384]{0}', space=vmem, size = 0x4000, scoped, tag = 'input window, operand 3, single buffered']
    #allocation6 [shape = 's32[1]{0}', space=sflag, size = 0x4, scoped, tag = 'scoped memory for tpu_custom_call.1']
    %15 = vsyncpa [#allocation4], 0
    %16 = vsyncpa [#allocation6], 0
    // Predicated region
    $region2: #{tpu_custom_call.1} parent=1 // pred_check
      _
    $region3: #{tpu_custom_call.1} parent=1 // pred_check_branch
      %18 = sbr.rel (0) target = $region5
    $region4: #{tpu_custom_call.1} parent=1 // pred_region
      %s20 = ssub.s32 256, 256
      %21 = vsyncadd [#allocation4], %s20
      %s22 = sshll.u32 [#allocation3], 4
      %s23 = int_to_ptr.vmem [resolvable:$true] %s22
      %28 = dma.hbm_to_vmem [thread:$0]  %s0, 256, %s23, [#allocation4], 128, 128, 8
    $region5: #{tpu_custom_call.1} parent=1 // pred_fallthru
      _
    // Predicated region
    $region6: #{tpu_custom_call.1} parent=1 // pred_check
      _
    $region7: #{tpu_custom_call.1} parent=1 // pred_check_branch
      %30 = sbr.rel (0) target = $region9
    $region8: #{tpu_custom_call.1} parent=1 // pred_region
      _
    $region9: #{tpu_custom_call.1} parent=1 // pred_fallthru
      _
    // Predicated region
    $region10: #{tpu_custom_call.1} parent=1 // pred_check
      _
    $region11: #{tpu_custom_call.1} parent=1 // pred_check_branch
      %32 = sbr.rel (0) target = $region13
    $region12: #{tpu_custom_call.1} parent=1 // pred_region
      _
    $region13: #{tpu_custom_call.1} parent=1 // pred_fallthru
      _
    // Predicated region
    $region14: #{tpu_custom_call.1} parent=1 // pred_check
      _
    $region15: #{tpu_custom_call.1} parent=1 // pred_check_branch
      %34 = sbr.rel (0) target = $region17
    $region16: #{tpu_custom_call.1} parent=1 // pred_region
      %s36 = ssub.s32 512, 512
      %37 = vsyncadd [#allocation6], %s36
      %s38 = sshll.u32 [#allocation5], 4
      %s39 = int_to_ptr.vmem [resolvable:$true] %s38
      %44 = dma.hbm_to_vmem [thread:$0]  %s3, 512, %s39, [#allocation6], 128, 128, 8
    $region17: #{tpu_custom_call.1} parent=1 // pred_fallthru
      _
    // Predicated region
    $region18: #{tpu_custom_call.1} parent=1 // pred_check
      _
    $region19: #{tpu_custom_call.1} parent=1 // pred_check_branch
      %46 = sbr.rel (0) target = $region21
    $region20: #{tpu_custom_call.1} parent=1 // pred_region
      _
    $region21: #{tpu_custom_call.1} parent=1 // pred_fallthru
      _
    // Predicated region
    $region22: #{tpu_custom_call.1} parent=1 // pred_check
      _
    $region23: #{tpu_custom_call.1} parent=1 // pred_check_branch
      %48 = sbr.rel (0) target = $region25
    $region24: #{tpu_custom_call.1} parent=1 // pred_region
      _
    $region25: #{tpu_custom_call.1} parent=1 // pred_fallthru
      _
    // Predicated region
    $region26: #{tpu_custom_call.1} parent=1 // pred_check
      _
    $region27: #{tpu_custom_call.1} parent=1 // pred_check_branch
      %50 = sbr.rel (0) target = $region29
    $region28: #{tpu_custom_call.1} parent=1 // pred_region
      _
    $region29: #{tpu_custom_call.1} parent=1 // pred_fallthru
      _
    // Predicated region
    $region30: #{tpu_custom_call.1} parent=1 // pred_check
      _
    $region31: #{tpu_custom_call.1} parent=1 // pred_check_branch
      %52 = sbr.rel (0) target = $region33
    $region32: #{tpu_custom_call.1} parent=1 // pred_region
      _
    $region33: #{tpu_custom_call.1} parent=1 // pred_fallthru
      _
    // Predicated region
    $region34: #{tpu_custom_call.1} parent=1 // pred_check
      _
    $region35: #{tpu_custom_call.1} parent=1 // pred_check_branch
      %54 = sbr.rel (0) target = $region37
    $region36: #{tpu_custom_call.1} parent=1 // pred_region
      %55 = dma.done [#allocation4], 256
    $region37: #{tpu_custom_call.1} parent=1 // pred_fallthru
      _
    // Predicated region
    $region38: #{tpu_custom_call.1} parent=1 // pred_check
      _
    $region39: #{tpu_custom_call.1} parent=1 // pred_check_branch
      %57 = sbr.rel (0) target = $region41
    $region40: #{tpu_custom_call.1} parent=1 // pred_region
      %58 = dma.done [#allocation6], 512
    $region41: #{tpu_custom_call.1} parent=1 // pred_fallthru
      _
    %v59 = vld [vmem:[#allocation3] sm:$0xff]
    %v60 = vld [vmem:[#allocation3 + $0x8] sm:$0xff]
    %v61 = vld [vmem:[%s1] sm:$0xff]
    %v62 = vld [vmem:[%s1 + $0x8] sm:$0xff]
    %v63 = vld [vmem:[%s1 + $0x10] sm:$0xff]
    %v64 = vld [vmem:[%s1 + $0x18] sm:$0xff]
    %v65 = vld [vmem:[%s2] sm:$0x1]
    %v67 = vlaneseq
    %v68 = vshrl.u32 %v67, 7
    %v69 = vsub.s32 0, %v68
    %v70 = vrot.slane %v65, %v69
    %vm72 = vcmask 261120
    %v74 = vsel %vm72, %v59, 0
    %v77 = vsel %vm72, %v60, 0
    %79 = vmatprep.subr.mxu0 0.0
    %80 = vmatpush1.msra.mxu0 0.0
    %81 = vmatprep.subr.mxu0 0.0
    %82 = vmatpush1.msra.mxu0 0.0
    %83 = vmatprep.subr.mxu0 0.0
    %84 = vmatpush1.msra.mxu0 0.0
    %85 = vmatprep.subr.mxu0 0.0
    %86 = vmatpush1.msra.mxu0 0.0
    %87 = vmatprep.subr.mxu0 0.0
    %88 = vmatpush1.msra.mxu0 0.0
    %89 = vmatprep.subr.mxu0 0.0
    %90 = vmatpush1.msra.mxu0 0.0
    %91 = vmatprep.subr.mxu0 0.0
    %92 = vmatpush1.msra.mxu0 0.0
    %93 = vmatprep.subr.mxu0 0.0
    %94 = vmatpush1.msra.mxu0 0.0
    %95 = vmatprep.subr.mxu0 0.0
    %96 = vmatpush1.msra.mxu0 0.0
    %97 = vmatprep.subr.mxu0 0.0
    %98 = vmatpush1.msra.mxu0 0.0
    %99 = vmatprep.subr.mxu0 0.0
    %100 = vmatpush1.msra.mxu0 0.0
    %101 = vmatprep.subr.mxu0 0.0
    %102 = vmatpush1.msra.mxu0 0.0
    %103 = vmatprep.subr.mxu0 0.0
    %104 = vmatpush1.msra.mxu0 %v64
    %105 = vmatprep.subr.mxu0 0.0
    %106 = vmatpush1.msra.mxu0 %v63
    %107 = vmatprep.subr.mxu0 0.0
    %108 = vmatpush1.msra.mxu0 %v62
    %109 = vmatprep.subr.mxu0 0.0
    %110 = vmatpush1.msra.mxu0 %v61
    %111 = vmatprep.subr.mxu0 0.0
    %112 = vmatpush2.msra.mxu0 0.0
    %113 = vmatprep.subr.mxu0 0.0
    %114 = vmatpush2.msra.mxu0 0.0
    %115 = vmatprep.subr.mxu0 0.0
    %116 = vmatpush2.msra.mxu0 0.0
    %117 = vmatprep.subr.mxu0 0.0
    %118 = vmatpush2.msra.mxu0 0.0
    %119 = vmatprep.subr.mxu0 0.0
    %120 = vmatpush2.msra.mxu0 0.0
    %121 = vmatprep.subr.mxu0 0.0
    %122 = vmatpush2.msra.mxu0 0.0
    %123 = vmatprep.subr.mxu0 0.0
    %124 = vmatpush2.msra.mxu0 0.0
    %125 = vmatprep.subr.mxu0 0.0
    %126 = vmatpush2.msra.mxu0 0.0
    %127 = vmatprep.subr.mxu0 0.0
    %128 = vmatpush2.msra.mxu0 0.0
    %129 = vmatprep.subr.mxu0 0.0
    %130 = vmatpush2.msra.mxu0 0.0
    %131 = vmatprep.subr.mxu0 0.0
    %132 = vmatpush2.msra.mxu0 0.0
    %133 = vmatprep.subr.mxu0 0.0
    %134 = vmatpush2.msra.mxu0 0.0
    %135 = vmatprep.subr.mxu0 0.0
    %136 = vmatpush2.msra.mxu0 0.0
    %137 = vmatprep.subr.mxu0 0.0
    %138 = vmatpush2.msra.mxu0 0.0
    %139 = vmatprep.subr.mxu0 0.0
    %140 = vmatpush2.msra.mxu0 0.0
    %141 = vmatprep.subr.mxu0 0.0
    %142 = vmatpush2.msra.mxu0 0.0
    %143 = vmatprep.mubr.f32.mxu0 0.0
    %144 = vmatmul.mubr.f32.gmra.mxu0 %v74
    %v145 = vpop.f32.mrf.mxu0
    %v146 = vadd.f32 %v70, %v145
    %v147 = vpop.f32.mrf.mxu0
    %148 = vmatprep.mubr.f32.mxu0 0.0
    %149 = vmatmul.mubr.f32.gmra.mxu0 %v77
    %v150 = vpop.f32.mrf.mxu0
    %v151 = vadd.f32 %v70, %v150
    %v152 = vpop.f32.mrf.mxu0
    %153 = vdwg.mxu0
    %v154 = vld [vmem:[#allocation5] sm:$0xff]
    %v155 = vld [vmem:[#allocation5 + $0x8] sm:$0xff]
    %v156 = vld [vmem:[#allocation5 + $0x10] sm:$0xff]
    %v157 = vld [vmem:[#allocation5 + $0x18] sm:$0xff]
    %v158 = vld [vmem:[%s4] sm:$0x3]
    %v159 = vld [vmem:[%s5] sm:$0x3]
    %v161 = vsel %vm72, %v158, 0
    %163 = vmatprep.subr.mxu0 0.0
    %164 = vmatpush1.msra.mxu0 0.0
    %165 = vmatprep.subr.mxu0 0.0
    %166 = vmatpush1.msra.mxu0 0.0
    %167 = vmatprep.subr.mxu0 0.0
    %168 = vmatpush1.msra.mxu0 0.0
    %169 = vmatprep.subr.mxu0 0.0
    %170 = vmatpush1.msra.mxu0 0.0
    %171 = vmatprep.subr.mxu0 0.0
    %172 = vmatpush1.msra.mxu0 0.0
    %173 = vmatprep.subr.mxu0 0.0
    %174 = vmatpush1.msra.mxu0 0.0
    %175 = vmatprep.subr.mxu0 0.0
    %176 = vmatpush1.msra.mxu0 0.0
    %177 = vmatprep.subr.mxu0 0.0
    %178 = vmatpush1.msra.mxu0 0.0
    %179 = vmatprep.subr.mxu0 0.0
    %180 = vmatpush1.msra.mxu0 0.0
    %181 = vmatprep.subr.mxu0 0.0
    %182 = vmatpush1.msra.mxu0 0.0
    %183 = vmatprep.subr.mxu0 0.0
    %184 = vmatpush1.msra.mxu0 0.0
    %185 = vmatprep.subr.mxu0 0.0
    %186 = vmatpush1.msra.mxu0 0.0
    %187 = vmatprep.subr.mxu0 0.0
    %188 = vmatpush1.msra.mxu0 %v157
    %189 = vmatprep.subr.mxu0 0.0
    %190 = vmatpush1.msra.mxu0 %v156
    %191 = vmatprep.subr.mxu0 0.0
    %192 = vmatpush1.msra.mxu0 %v155
    %193 = vmatprep.subr.mxu0 0.0
    %194 = vmatpush1.msra.mxu0 %v154
    %195 = vmatprep.subr.mxu0 0.0
    %196 = vmatpush2.msra.mxu0 0.0
    %197 = vmatprep.subr.mxu0 0.0
    %198 = vmatpush2.msra.mxu0 0.0
    %199 = vmatprep.subr.mxu0 0.0
    %200 = vmatpush2.msra.mxu0 0.0
    %201 = vmatprep.subr.mxu0 0.0
    %202 = vmatpush2.msra.mxu0 0.0
    %203 = vmatprep.subr.mxu0 0.0
    %204 = vmatpush2.msra.mxu0 0.0
    %205 = vmatprep.subr.mxu0 0.0
    %206 = vmatpush2.msra.mxu0 0.0
    %207 = vmatprep.subr.mxu0 0.0
    %208 = vmatpush2.msra.mxu0 0.0
    %209 = vmatprep.subr.mxu0 0.0
    %210 = vmatpush2.msra.mxu0 0.0
    %211 = vmatprep.subr.mxu0 0.0
    %212 = vmatpush2.msra.mxu0 0.0
    %213 = vmatprep.subr.mxu0 0.0
    %214 = vmatpush2.msra.mxu0 0.0
    %215 = vmatprep.subr.mxu0 0.0
    %216 = vmatpush2.msra.mxu0 0.0
    %217 = vmatprep.subr.mxu0 0.0
    %218 = vmatpush2.msra.mxu0 0.0
    %219 = vmatprep.subr.mxu0 0.0
    %220 = vmatpush2.msra.mxu0 0.0
    %221 = vmatprep.subr.mxu0 0.0
    %222 = vmatpush2.msra.mxu0 0.0
    %223 = vmatprep.subr.mxu0 0.0
    %224 = vmatpush2.msra.mxu0 0.0
    %225 = vmatprep.subr.mxu0 0.0
    %226 = vmatpush2.msra.mxu0 0.0
    %227 = vmatprep.mubr.f32.mxu0 0.0
    %228 = vmatmul.mubr.f32.gmra.mxu0 %v161
    %v229 = vpop.f32.mrf.mxu0
    %v230 = vadd.f32 %v146, %v229
    %v231 = vpop.f32.mrf.mxu0
    %232 = vdwg.mxu0
    %v233 = vxor.u32 %v230, 2147483648
    %v234 = vmul.f32 %v233, 1.442695
    %v235 = vpow.pop %v234
    %v236 = vadd.f32 %v235, 1.0
    %v237 = vrcp.pop %v236
    %v238 = vmul.f32 1.0, %v237
    %v239 = vtanh.pop %v230
    %241 = vrot.lane.b32.xlu0 %v159, 32
    %v242 = vpop.permute.xlu0 %241
    %v244 = vmul.f32 %v238, %v242
    %246 = vrot.lane.b32.xlu0 %v239, 32
    %v247 = vpop.permute.xlu0 %246
    %v249 = vmul.f32 %v238, %v247
    %251 = vrot.lane.b32.xlu0 %v249, 32
    %v252 = vpop.permute.xlu0 %251
    %v254 = vadd.f32 %v244, %v252
    %v255 = vtanh.pop %v254
    %257 = vrot.lane.b32.xlu0 %v255, 32
    %v258 = vpop.permute.xlu0 %257
    %v260 = vmul.f32 %v238, %v258
    %262 = vrot.lane.b32.xlu0 %v260, 64
    %v263 = vpop.permute.xlu0 %262
    %v265 = vrot.slane %v146, 2
    %v267 = vsel %vm72, %v263, 0
    %269 = vmatprep.subr.mxu0 0.0
    %270 = vmatpush1.msra.mxu0 0.0
    %271 = vmatprep.subr.mxu0 0.0
    %272 = vmatpush1.msra.mxu0 0.0
    %273 = vmatprep.subr.mxu0 0.0
    %274 = vmatpush1.msra.mxu0 0.0
    %275 = vmatprep.subr.mxu0 0.0
    %276 = vmatpush1.msra.mxu0 0.0
    %277 = vmatprep.subr.mxu0 0.0
    %278 = vmatpush1.msra.mxu0 0.0
    %279 = vmatprep.subr.mxu0 0.0
    %280 = vmatpush1.msra.mxu0 0.0
    %281 = vmatprep.subr.mxu0 0.0
    %282 = vmatpush1.msra.mxu0 0.0
    %283 = vmatprep.subr.mxu0 0.0
    %284 = vmatpush1.msra.mxu0 0.0
    %285 = vmatprep.subr.mxu0 0.0
    %286 = vmatpush1.msra.mxu0 0.0
    %287 = vmatprep.subr.mxu0 0.0
    %288 = vmatpush1.msra.mxu0 0.0
    %289 = vmatprep.subr.mxu0 0.0
    %290 = vmatpush1.msra.mxu0 0.0
    %291 = vmatprep.subr.mxu0 0.0
    %292 = vmatpush1.msra.mxu0 0.0
    %293 = vmatprep.subr.mxu0 0.0
    %294 = vmatpush1.msra.mxu0 %v157
    %295 = vmatprep.subr.mxu0 0.0
    %296 = vmatpush1.msra.mxu0 %v156
    %297 = vmatprep.subr.mxu0 0.0
    %298 = vmatpush1.msra.mxu0 %v155
    %299 = vmatprep.subr.mxu0 0.0
    %300 = vmatpush1.msra.mxu0 %v154
    %301 = vmatprep.subr.mxu0 0.0
    %302 = vmatpush2.msra.mxu0 0.0
    %303 = vmatprep.subr.mxu0 0.0
    %304 = vmatpush2.msra.mxu0 0.0
    %305 = vmatprep.subr.mxu0 0.0
    %306 = vmatpush2.msra.mxu0 0.0
    %307 = vmatprep.subr.mxu0 0.0
    %308 = vmatpush2.msra.mxu0 0.0
    %309 = vmatprep.subr.mxu0 0.0
    %310 = vmatpush2.msra.mxu0 0.0
    %311 = vmatprep.subr.mxu0 0.0
    %312 = vmatpush2.msra.mxu0 0.0
    %313 = vmatprep.subr.mxu0 0.0
    %314 = vmatpush2.msra.mxu0 0.0
    %315 = vmatprep.subr.mxu0 0.0
    %316 = vmatpush2.msra.mxu0 0.0
    %317 = vmatprep.subr.mxu0 0.0
    %318 = vmatpush2.msra.mxu0 0.0
    %319 = vmatprep.subr.mxu0 0.0
    %320 = vmatpush2.msra.mxu0 0.0
    %321 = vmatprep.subr.mxu0 0.0
    %322 = vmatpush2.msra.mxu0 0.0
    %323 = vmatprep.subr.mxu0 0.0
    %324 = vmatpush2.msra.mxu0 0.0
    %325 = vmatprep.subr.mxu0 0.0
    %326 = vmatpush2.msra.mxu0 0.0
    %327 = vmatprep.subr.mxu0 0.0
    %328 = vmatpush2.msra.mxu0 0.0
    %329 = vmatprep.subr.mxu0 0.0
    %330 = vmatpush2.msra.mxu0 0.0
    %331 = vmatprep.subr.mxu0 0.0
    %332 = vmatpush2.msra.mxu0 0.0
    %333 = vmatprep.mubr.f32.mxu0 0.0
    %334 = vmatmul.mubr.f32.gmra.mxu0 %v267
    %v335 = vpop.f32.mrf.mxu0
    %v336 = vadd.f32 %v265, %v335
    %v337 = vpop.f32.mrf.mxu0
    %338 = vdwg.mxu0
    %v339 = vxor.u32 %v336, 2147483648
    %v340 = vmul.f32 %v339, 1.442695
    %v341 = vpow.pop %v340
    %v342 = vadd.f32 %v341, 1.0
    %v343 = vrcp.pop %v342
    %v344 = vmul.f32 1.0, %v343
    %v345 = vtanh.pop %v336
    %v346 = vmul.f32 %v344, %v254
    %348 = vrot.lane.b32.xlu0 %v345, 32
    %v349 = vpop.permute.xlu0 %348
    %v351 = vmul.f32 %v344, %v349
    %353 = vrot.lane.b32.xlu0 %v351, 32
    %v354 = vpop.permute.xlu0 %353
    %v356 = vadd.f32 %v346, %v354
    %v357 = vtanh.pop %v356
    %359 = vrot.lane.b32.xlu0 %v357, 32
    %v360 = vpop.permute.xlu0 %359
    %v362 = vmul.f32 %v344, %v360
    %364 = vrot.lane.b32.xlu0 %v362, 64
    %v365 = vpop.permute.xlu0 %364
    %v366 = vrot.slane %v146, 4
    %v368 = vsel %vm72, %v365, 0
    %370 = vmatprep.subr.mxu0 0.0
    %371 = vmatpush1.msra.mxu0 0.0
    %372 = vmatprep.subr.mxu0 0.0
    %373 = vmatpush1.msra.mxu0 0.0
    %374 = vmatprep.subr.mxu0 0.0
    %375 = vmatpush1.msra.mxu0 0.0
    %376 = vmatprep.subr.mxu0 0.0
    %377 = vmatpush1.msra.mxu0 0.0
    %378 = vmatprep.subr.mxu0 0.0
    %379 = vmatpush1.msra.mxu0 0.0
    %380 = vmatprep.subr.mxu0 0.0
    %381 = vmatpush1.msra.mxu0 0.0
    %382 = vmatprep.subr.mxu0 0.0
    %383 = vmatpush1.msra.mxu0 0.0
    %384 = vmatprep.subr.mxu0 0.0
    %385 = vmatpush1.msra.mxu0 0.0
    %386 = vmatprep.subr.mxu0 0.0
    %387 = vmatpush1.msra.mxu0 0.0
    %388 = vmatprep.subr.mxu0 0.0
    %389 = vmatpush1.msra.mxu0 0.0
    %390 = vmatprep.subr.mxu0 0.0
    %391 = vmatpush1.msra.mxu0 0.0
    %392 = vmatprep.subr.mxu0 0.0
    %393 = vmatpush1.msra.mxu0 0.0
    %394 = vmatprep.subr.mxu0 0.0
    %395 = vmatpush1.msra.mxu0 %v157
    %396 = vmatprep.subr.mxu0 0.0
    %397 = vmatpush1.msra.mxu0 %v156
    %398 = vmatprep.subr.mxu0 0.0
    %399 = vmatpush1.msra.mxu0 %v155
    %400 = vmatprep.subr.mxu0 0.0
    %401 = vmatpush1.msra.mxu0 %v154
    %402 = vmatprep.subr.mxu0 0.0
    %403 = vmatpush2.msra.mxu0 0.0
    %404 = vmatprep.subr.mxu0 0.0
    %405 = vmatpush2.msra.mxu0 0.0
    %406 = vmatprep.subr.mxu0 0.0
    %407 = vmatpush2.msra.mxu0 0.0
    %408 = vmatprep.subr.mxu0 0.0
    %409 = vmatpush2.msra.mxu0 0.0
    %410 = vmatprep.subr.mxu0 0.0
    %411 = vmatpush2.msra.mxu0 0.0
    %412 = vmatprep.subr.mxu0 0.0
    %413 = vmatpush2.msra.mxu0 0.0
    %414 = vmatprep.subr.mxu0 0.0
    %415 = vmatpush2.msra.mxu0 0.0
    %416 = vmatprep.subr.mxu0 0.0
    %417 = vmatpush2.msra.mxu0 0.0
    %418 = vmatprep.subr.mxu0 0.0
    %419 = vmatpush2.msra.mxu0 0.0
    %420 = vmatprep.subr.mxu0 0.0
    %421 = vmatpush2.msra.mxu0 0.0
    %422 = vmatprep.subr.mxu0 0.0
    %423 = vmatpush2.msra.mxu0 0.0
    %424 = vmatprep.subr.mxu0 0.0
    %425 = vmatpush2.msra.mxu0 0.0
    %426 = vmatprep.subr.mxu0 0.0
    %427 = vmatpush2.msra.mxu0 0.0
    %428 = vmatprep.subr.mxu0 0.0
    %429 = vmatpush2.msra.mxu0 0.0
    %430 = vmatprep.subr.mxu0 0.0
    %431 = vmatpush2.msra.mxu0 0.0
    %432 = vmatprep.subr.mxu0 0.0
    %433 = vmatpush2.msra.mxu0 0.0
    %434 = vmatprep.mubr.f32.mxu0 0.0
    %435 = vmatmul.mubr.f32.gmra.mxu0 %v368
    %v436 = vpop.f32.mrf.mxu0
    %v437 = vadd.f32 %v366, %v436
    %v438 = vpop.f32.mrf.mxu0
    %439 = vdwg.mxu0
    %v440 = vxor.u32 %v437, 2147483648
    %v441 = vmul.f32 %v440, 1.442695
    %v442 = vpow.pop %v441
    %v443 = vadd.f32 %v442, 1.0
    %v444 = vrcp.pop %v443
    %v445 = vmul.f32 1.0, %v444
    %v446 = vtanh.pop %v437
    %v447 = vmul.f32 %v445, %v356
    %449 = vrot.lane.b32.xlu0 %v446, 32
    %v450 = vpop.permute.xlu0 %449
    %v452 = vmul.f32 %v445, %v450
    %454 = vrot.lane.b32.xlu0 %v452, 32
    %v455 = vpop.permute.xlu0 %454
    %v457 = vadd.f32 %v447, %v455
    %v458 = vtanh.pop %v457
    %460 = vrot.lane.b32.xlu0 %v458, 32
    %v461 = vpop.permute.xlu0 %460
    %v463 = vmul.f32 %v445, %v461
    %465 = vrot.lane.b32.xlu0 %v463, 64
    %v466 = vpop.permute.xlu0 %465
    %v467 = vrot.slane %v146, 6
    %v469 = vsel %vm72, %v466, 0
    %471 = vmatprep.subr.mxu0 0.0
    %472 = vmatpush1.msra.mxu0 0.0
    %473 = vmatprep.subr.mxu0 0.0
    %474 = vmatpush1.msra.mxu0 0.0
    %475 = vmatprep.subr.mxu0 0.0
    %476 = vmatpush1.msra.mxu0 0.0
    %477 = vmatprep.subr.mxu0 0.0
    %478 = vmatpush1.msra.mxu0 0.0
    %479 = vmatprep.subr.mxu0 0.0
    %480 = vmatpush1.msra.mxu0 0.0
    %481 = vmatprep.subr.mxu0 0.0
    %482 = vmatpush1.msra.mxu0 0.0
    %483 = vmatprep.subr.mxu0 0.0
    %484 = vmatpush1.msra.mxu0 0.0
    %485 = vmatprep.subr.mxu0 0.0
    %486 = vmatpush1.msra.mxu0 0.0
    %487 = vmatprep.subr.mxu0 0.0
    %488 = vmatpush1.msra.mxu0 0.0
    %489 = vmatprep.subr.mxu0 0.0
    %490 = vmatpush1.msra.mxu0 0.0
    %491 = vmatprep.subr.mxu0 0.0
    %492 = vmatpush1.msra.mxu0 0.0
    %493 = vmatprep.subr.mxu0 0.0
    %494 = vmatpush1.msra.mxu0 0.0
    %495 = vmatprep.subr.mxu0 0.0
    %496 = vmatpush1.msra.mxu0 %v157
    %497 = vmatprep.subr.mxu0 0.0
    %498 = vmatpush1.msra.mxu0 %v156
    %499 = vmatprep.subr.mxu0 0.0
    %500 = vmatpush1.msra.mxu0 %v155
    %501 = vmatprep.subr.mxu0 0.0
    %502 = vmatpush1.msra.mxu0 %v154
    %503 = vmatprep.subr.mxu0 0.0
    %504 = vmatpush2.msra.mxu0 0.0
    %505 = vmatprep.subr.mxu0 0.0
    %506 = vmatpush2.msra.mxu0 0.0
    %507 = vmatprep.subr.mxu0 0.0
    %508 = vmatpush2.msra.mxu0 0.0
    %509 = vmatprep.subr.mxu0 0.0
    %510 = vmatpush2.msra.mxu0 0.0
    %511 = vmatprep.subr.mxu0 0.0
    %512 = vmatpush2.msra.mxu0 0.0
    %513 = vmatprep.subr.mxu0 0.0
    %514 = vmatpush2.msra.mxu0 0.0
    %515 = vmatprep.subr.mxu0 0.0
    %516 = vmatpush2.msra.mxu0 0.0
    %517 = vmatprep.subr.mxu0 0.0
    %518 = vmatpush2.msra.mxu0 0.0
    %519 = vmatprep.subr.mxu0 0.0
    %520 = vmatpush2.msra.mxu0 0.0
    %521 = vmatprep.subr.mxu0 0.0
    %522 = vmatpush2.msra.mxu0 0.0
    %523 = vmatprep.subr.mxu0 0.0
    %524 = vmatpush2.msra.mxu0 0.0
    %525 = vmatprep.subr.mxu0 0.0
    %526 = vmatpush2.msra.mxu0 0.0
    %527 = vmatprep.subr.mxu0 0.0
    %528 = vmatpush2.msra.mxu0 0.0
    %529 = vmatprep.subr.mxu0 0.0
    %530 = vmatpush2.msra.mxu0 0.0
    %531 = vmatprep.subr.mxu0 0.0
    %532 = vmatpush2.msra.mxu0 0.0
    %533 = vmatprep.subr.mxu0 0.0
    %534 = vmatpush2.msra.mxu0 0.0
    %535 = vmatprep.mubr.f32.mxu0 0.0
    %536 = vmatmul.mubr.f32.gmra.mxu0 %v469
    %v537 = vpop.f32.mrf.mxu0
    %v538 = vadd.f32 %v467, %v537
    %v539 = vpop.f32.mrf.mxu0
    %540 = vdwg.mxu0
    %v541 = vxor.u32 %v538, 2147483648
    %v542 = vmul.f32 %v541, 1.442695
    %v543 = vpow.pop %v542
    %v544 = vadd.f32 %v543, 1.0
    %v545 = vrcp.pop %v544
    %v546 = vmul.f32 1.0, %v545
    %v547 = vtanh.pop %v538
    %v548 = vmul.f32 %v546, %v457
    %550 = vrot.lane.b32.xlu0 %v547, 32
    %v551 = vpop.permute.xlu0 %550
    %v553 = vmul.f32 %v546, %v551
    %555 = vrot.lane.b32.xlu0 %v553, 32
    %v556 = vpop.permute.xlu0 %555
    %v558 = vadd.f32 %v548, %v556
    %v559 = vtanh.pop %v558
    %561 = vrot.lane.b32.xlu0 %v559, 32
    %v562 = vpop.permute.xlu0 %561
    %v564 = vmul.f32 %v546, %v562
    %566 = vrot.lane.b32.xlu0 %v564, 64
    %v567 = vpop.permute.xlu0 %566
    %v568 = vsel %vm72, %v567, 0
    %570 = vmatprep.subr.mxu0 0.0
    %571 = vmatpush1.msra.mxu0 0.0
    %572 = vmatprep.subr.mxu0 0.0
    %573 = vmatpush1.msra.mxu0 0.0
    %574 = vmatprep.subr.mxu0 0.0
    %575 = vmatpush1.msra.mxu0 0.0
    %576 = vmatprep.subr.mxu0 0.0
    %577 = vmatpush1.msra.mxu0 0.0
    %578 = vmatprep.subr.mxu0 0.0
    %579 = vmatpush1.msra.mxu0 0.0
    %580 = vmatprep.subr.mxu0 0.0
    %581 = vmatpush1.msra.mxu0 0.0
    %582 = vmatprep.subr.mxu0 0.0
    %583 = vmatpush1.msra.mxu0 0.0
    %584 = vmatprep.subr.mxu0 0.0
    %585 = vmatpush1.msra.mxu0 0.0
    %586 = vmatprep.subr.mxu0 0.0
    %587 = vmatpush1.msra.mxu0 0.0
    %588 = vmatprep.subr.mxu0 0.0
    %589 = vmatpush1.msra.mxu0 0.0
    %590 = vmatprep.subr.mxu0 0.0
    %591 = vmatpush1.msra.mxu0 0.0
    %592 = vmatprep.subr.mxu0 0.0
    %593 = vmatpush1.msra.mxu0 0.0
    %594 = vmatprep.subr.mxu0 0.0
    %595 = vmatpush1.msra.mxu0 %v157
    %596 = vmatprep.subr.mxu0 0.0
    %597 = vmatpush1.msra.mxu0 %v156
    %598 = vmatprep.subr.mxu0 0.0
    %599 = vmatpush1.msra.mxu0 %v155
    %600 = vmatprep.subr.mxu0 0.0
    %601 = vmatpush1.msra.mxu0 %v154
    %602 = vmatprep.subr.mxu0 0.0
    %603 = vmatpush2.msra.mxu0 0.0
    %604 = vmatprep.subr.mxu0 0.0
    %605 = vmatpush2.msra.mxu0 0.0
    %606 = vmatprep.subr.mxu0 0.0
    %607 = vmatpush2.msra.mxu0 0.0
    %608 = vmatprep.subr.mxu0 0.0
    %609 = vmatpush2.msra.mxu0 0.0
    %610 = vmatprep.subr.mxu0 0.0
    %611 = vmatpush2.msra.mxu0 0.0
    %612 = vmatprep.subr.mxu0 0.0
    %613 = vmatpush2.msra.mxu0 0.0
    %614 = vmatprep.subr.mxu0 0.0
    %615 = vmatpush2.msra.mxu0 0.0
    %616 = vmatprep.subr.mxu0 0.0
    %617 = vmatpush2.msra.mxu0 0.0
    %618 = vmatprep.subr.mxu0 0.0
    %619 = vmatpush2.msra.mxu0 0.0
    %620 = vmatprep.subr.mxu0 0.0
    %621 = vmatpush2.msra.mxu0 0.0
    %622 = vmatprep.subr.mxu0 0.0
    %623 = vmatpush2.msra.mxu0 0.0
    %624 = vmatprep.subr.mxu0 0.0
    %625 = vmatpush2.msra.mxu0 0.0
    %626 = vmatprep.subr.mxu0 0.0
    %627 = vmatpush2.msra.mxu0 0.0
    %628 = vmatprep.subr.mxu0 0.0
    %629 = vmatpush2.msra.mxu0 0.0
    %630 = vmatprep.subr.mxu0 0.0
    %631 = vmatpush2.msra.mxu0 0.0
    %632 = vmatprep.subr.mxu0 0.0
    %633 = vmatpush2.msra.mxu0 0.0
    %634 = vmatprep.mubr.f32.mxu0 0.0
    %635 = vmatmul.mubr.f32.gmra.mxu0 %v568
    %v636 = vpop.f32.mrf.mxu0
    %v637 = vadd.f32 %v151, %v636
    %v638 = vpop.f32.mrf.mxu0
    %639 = vdwg.mxu0
    %v640 = vxor.u32 %v637, 2147483648
    %v641 = vmul.f32 %v640, 1.442695
    %v642 = vpow.pop %v641
    %v643 = vadd.f32 %v642, 1.0
    %v644 = vrcp.pop %v643
    %v645 = vmul.f32 1.0, %v644
    %v646 = vtanh.pop %v637
    %v647 = vmul.f32 %v645, %v558
    %649 = vrot.lane.b32.xlu0 %v646, 32
    %v650 = vpop.permute.xlu0 %649
    %v652 = vmul.f32 %v645, %v650
    %654 = vrot.lane.b32.xlu0 %v652, 32
    %v655 = vpop.permute.xlu0 %654
    %v657 = vadd.f32 %v647, %v655
    %v658 = vtanh.pop %v657
    %660 = vrot.lane.b32.xlu0 %v658, 32
    %v661 = vpop.permute.xlu0 %660
    %v663 = vmul.f32 %v645, %v661
    %665 = vrot.lane.b32.xlu0 %v663, 64
    %v666 = vpop.permute.xlu0 %665
    %v668 = vrot.slane %v151, 2
    %v670 = vsel %vm72, %v666, 0
    %672 = vmatprep.subr.mxu0 0.0
    %673 = vmatpush1.msra.mxu0 0.0
    %674 = vmatprep.subr.mxu0 0.0
    %675 = vmatpush1.msra.mxu0 0.0
    %676 = vmatprep.subr.mxu0 0.0
    %677 = vmatpush1.msra.mxu0 0.0
    %678 = vmatprep.subr.mxu0 0.0
    %679 = vmatpush1.msra.mxu0 0.0
    %680 = vmatprep.subr.mxu0 0.0
    %681 = vmatpush1.msra.mxu0 0.0
    %682 = vmatprep.subr.mxu0 0.0
    %683 = vmatpush1.msra.mxu0 0.0
    %684 = vmatprep.subr.mxu0 0.0
    %685 = vmatpush1.msra.mxu0 0.0
    %686 = vmatprep.subr.mxu0 0.0
    %687 = vmatpush1.msra.mxu0 0.0
    %688 = vmatprep.subr.mxu0 0.0
    %689 = vmatpush1.msra.mxu0 0.0
    %690 = vmatprep.subr.mxu0 0.0
    %691 = vmatpush1.msra.mxu0 0.0
    %692 = vmatprep.subr.mxu0 0.0
    %693 = vmatpush1.msra.mxu0 0.0
    %694 = vmatprep.subr.mxu0 0.0
    %695 = vmatpush1.msra.mxu0 0.0
    %696 = vmatprep.subr.mxu0 0.0
    %697 = vmatpush1.msra.mxu0 %v157
    %698 = vmatprep.subr.mxu0 0.0
    %699 = vmatpush1.msra.mxu0 %v156
    %700 = vmatprep.subr.mxu0 0.0
    %701 = vmatpush1.msra.mxu0 %v155
    %702 = vmatprep.subr.mxu0 0.0
    %703 = vmatpush1.msra.mxu0 %v154
    %704 = vmatprep.subr.mxu0 0.0
    %705 = vmatpush2.msra.mxu0 0.0
    %706 = vmatprep.subr.mxu0 0.0
    %707 = vmatpush2.msra.mxu0 0.0
    %708 = vmatprep.subr.mxu0 0.0
    %709 = vmatpush2.msra.mxu0 0.0
    %710 = vmatprep.subr.mxu0 0.0
    %711 = vmatpush2.msra.mxu0 0.0
    %712 = vmatprep.subr.mxu0 0.0
    %713 = vmatpush2.msra.mxu0 0.0
    %714 = vmatprep.subr.mxu0 0.0
    %715 = vmatpush2.msra.mxu0 0.0
    %716 = vmatprep.subr.mxu0 0.0
    %717 = vmatpush2.msra.mxu0 0.0
    %718 = vmatprep.subr.mxu0 0.0
    %719 = vmatpush2.msra.mxu0 0.0
    %720 = vmatprep.subr.mxu0 0.0
    %721 = vmatpush2.msra.mxu0 0.0
    %722 = vmatprep.subr.mxu0 0.0
    %723 = vmatpush2.msra.mxu0 0.0
    %724 = vmatprep.subr.mxu0 0.0
    %725 = vmatpush2.msra.mxu0 0.0
    %726 = vmatprep.subr.mxu0 0.0
    %727 = vmatpush2.msra.mxu0 0.0
    %728 = vmatprep.subr.mxu0 0.0
    %729 = vmatpush2.msra.mxu0 0.0
    %730 = vmatprep.subr.mxu0 0.0
    %731 = vmatpush2.msra.mxu0 0.0
    %732 = vmatprep.subr.mxu0 0.0
    %733 = vmatpush2.msra.mxu0 0.0
    %734 = vmatprep.subr.mxu0 0.0
    %735 = vmatpush2.msra.mxu0 0.0
    %736 = vmatprep.mubr.f32.mxu0 0.0
    %737 = vmatmul.mubr.f32.gmra.mxu0 %v670
    %v738 = vpop.f32.mrf.mxu0
    %v739 = vadd.f32 %v668, %v738
    %v740 = vpop.f32.mrf.mxu0
    %741 = vdwg.mxu0
    %v742 = vxor.u32 %v739, 2147483648
    %v743 = vmul.f32 %v742, 1.442695
    %v744 = vpow.pop %v743
    %v745 = vadd.f32 %v744, 1.0
    %v746 = vrcp.pop %v745
    %v747 = vmul.f32 1.0, %v746
    %v748 = vtanh.pop %v739
    %v749 = vmul.f32 %v747, %v657
    %751 = vrot.lane.b32.xlu0 %v748, 32
    %v752 = vpop.permute.xlu0 %751
    %v754 = vmul.f32 %v747, %v752
    %756 = vrot.lane.b32.xlu0 %v754, 32
    %v757 = vpop.permute.xlu0 %756
    %v759 = vadd.f32 %v749, %v757
    %v760 = vtanh.pop %v759
    %762 = vrot.lane.b32.xlu0 %v760, 32
    %v763 = vpop.permute.xlu0 %762
    %v765 = vmul.f32 %v747, %v763
    %767 = vrot.lane.b32.xlu0 %v765, 64
    %v768 = vpop.permute.xlu0 %767
    %v769 = vrot.slane %v151, 4
    %v771 = vsel %vm72, %v768, 0
    %773 = vmatprep.subr.mxu0 0.0
    %774 = vmatpush1.msra.mxu0 0.0
    %775 = vmatprep.subr.mxu0 0.0
    %776 = vmatpush1.msra.mxu0 0.0
    %777 = vmatprep.subr.mxu0 0.0
    %778 = vmatpush1.msra.mxu0 0.0
    %779 = vmatprep.subr.mxu0 0.0
    %780 = vmatpush1.msra.mxu0 0.0
    %781 = vmatprep.subr.mxu0 0.0
    %782 = vmatpush1.msra.mxu0 0.0
    %783 = vmatprep.subr.mxu0 0.0
    %784 = vmatpush1.msra.mxu0 0.0
    %785 = vmatprep.subr.mxu0 0.0
    %786 = vmatpush1.msra.mxu0 0.0
    %787 = vmatprep.subr.mxu0 0.0
    %788 = vmatpush1.msra.mxu0 0.0
    %789 = vmatprep.subr.mxu0 0.0
    %790 = vmatpush1.msra.mxu0 0.0
    %791 = vmatprep.subr.mxu0 0.0
    %792 = vmatpush1.msra.mxu0 0.0
    %793 = vmatprep.subr.mxu0 0.0
    %794 = vmatpush1.msra.mxu0 0.0
    %795 = vmatprep.subr.mxu0 0.0
    %796 = vmatpush1.msra.mxu0 0.0
    %797 = vmatprep.subr.mxu0 0.0
    %798 = vmatpush1.msra.mxu0 %v157
    %799 = vmatprep.subr.mxu0 0.0
    %800 = vmatpush1.msra.mxu0 %v156
    %801 = vmatprep.subr.mxu0 0.0
    %802 = vmatpush1.msra.mxu0 %v155
    %803 = vmatprep.subr.mxu0 0.0
    %804 = vmatpush1.msra.mxu0 %v154
    %805 = vmatprep.subr.mxu0 0.0
    %806 = vmatpush2.msra.mxu0 0.0
    %807 = vmatprep.subr.mxu0 0.0
    %808 = vmatpush2.msra.mxu0 0.0
    %809 = vmatprep.subr.mxu0 0.0
    %810 = vmatpush2.msra.mxu0 0.0
    %811 = vmatprep.subr.mxu0 0.0
    %812 = vmatpush2.msra.mxu0 0.0
    %813 = vmatprep.subr.mxu0 0.0
    %814 = vmatpush2.msra.mxu0 0.0
    %815 = vmatprep.subr.mxu0 0.0
    %816 = vmatpush2.msra.mxu0 0.0
    %817 = vmatprep.subr.mxu0 0.0
    %818 = vmatpush2.msra.mxu0 0.0
    %819 = vmatprep.subr.mxu0 0.0
    %820 = vmatpush2.msra.mxu0 0.0
    %821 = vmatprep.subr.mxu0 0.0
    %822 = vmatpush2.msra.mxu0 0.0
    %823 = vmatprep.subr.mxu0 0.0
    %824 = vmatpush2.msra.mxu0 0.0
    %825 = vmatprep.subr.mxu0 0.0
    %826 = vmatpush2.msra.mxu0 0.0
    %827 = vmatprep.subr.mxu0 0.0
    %828 = vmatpush2.msra.mxu0 0.0
    %829 = vmatprep.subr.mxu0 0.0
    %830 = vmatpush2.msra.mxu0 0.0
    %831 = vmatprep.subr.mxu0 0.0
    %832 = vmatpush2.msra.mxu0 0.0
    %833 = vmatprep.subr.mxu0 0.0
    %834 = vmatpush2.msra.mxu0 0.0
    %835 = vmatprep.subr.mxu0 0.0
    %836 = vmatpush2.msra.mxu0 0.0
    %837 = vmatprep.mubr.f32.mxu0 0.0
    %838 = vmatmul.mubr.f32.gmra.mxu0 %v771
    %v839 = vpop.f32.mrf.mxu0
    %v840 = vadd.f32 %v769, %v839
    %v841 = vpop.f32.mrf.mxu0
    %842 = vdwg.mxu0
    %v843 = vxor.u32 %v840, 2147483648
    %v844 = vmul.f32 %v843, 1.442695
    %v845 = vpow.pop %v844
    %v846 = vadd.f32 %v845, 1.0
    %v847 = vrcp.pop %v846
    %v848 = vmul.f32 1.0, %v847
    %v849 = vtanh.pop %v840
    %v850 = vmul.f32 %v848, %v759
    %852 = vrot.lane.b32.xlu0 %v849, 32
    %v853 = vpop.permute.xlu0 %852
    %v855 = vmul.f32 %v848, %v853
    %857 = vrot.lane.b32.xlu0 %v855, 32
    %v858 = vpop.permute.xlu0 %857
    %v860 = vadd.f32 %v850, %v858
    %v861 = vtanh.pop %v860
    %863 = vrot.lane.b32.xlu0 %v861, 32
    %v864 = vpop.permute.xlu0 %863
    %v866 = vmul.f32 %v848, %v864
    %868 = vrot.lane.b32.xlu0 %v866, 64
    %v869 = vpop.permute.xlu0 %868
    %v870 = vrot.slane %v151, 6
    %v872 = vsel %vm72, %v869, 0
    %874 = vmatprep.subr.mxu0 0.0
    %875 = vmatpush1.msra.mxu0 0.0
    %876 = vmatprep.subr.mxu0 0.0
    %877 = vmatpush1.msra.mxu0 0.0
    %878 = vmatprep.subr.mxu0 0.0
    %879 = vmatpush1.msra.mxu0 0.0
    %880 = vmatprep.subr.mxu0 0.0
    %881 = vmatpush1.msra.mxu0 0.0
    %882 = vmatprep.subr.mxu0 0.0
    %883 = vmatpush1.msra.mxu0 0.0
    %884 = vmatprep.subr.mxu0 0.0
    %885 = vmatpush1.msra.mxu0 0.0
    %886 = vmatprep.subr.mxu0 0.0
    %887 = vmatpush1.msra.mxu0 0.0
    %888 = vmatprep.subr.mxu0 0.0
    %889 = vmatpush1.msra.mxu0 0.0
    %890 = vmatprep.subr.mxu0 0.0
    %891 = vmatpush1.msra.mxu0 0.0
    %892 = vmatprep.subr.mxu0 0.0
    %893 = vmatpush1.msra.mxu0 0.0
    %894 = vmatprep.subr.mxu0 0.0
    %895 = vmatpush1.msra.mxu0 0.0
    %896 = vmatprep.subr.mxu0 0.0
    %897 = vmatpush1.msra.mxu0 0.0
    %898 = vmatprep.subr.mxu0 0.0
    %899 = vmatpush1.msra.mxu0 %v157
    %900 = vmatprep.subr.mxu0 0.0
    %901 = vmatpush1.msra.mxu0 %v156
    %902 = vmatprep.subr.mxu0 0.0
    %903 = vmatpush1.msra.mxu0 %v155
    %904 = vmatprep.subr.mxu0 0.0
    %905 = vmatpush1.msra.mxu0 %v154
    %906 = vmatprep.subr.mxu0 0.0
    %907 = vmatpush2.msra.mxu0 0.0
    %908 = vmatprep.subr.mxu0 0.0
    %909 = vmatpush2.msra.mxu0 0.0
    %910 = vmatprep.subr.mxu0 0.0
    %911 = vmatpush2.msra.mxu0 0.0
    %912 = vmatprep.subr.mxu0 0.0
    %913 = vmatpush2.msra.mxu0 0.0
    %914 = vmatprep.subr.mxu0 0.0
    %915 = vmatpush2.msra.mxu0 0.0
    %916 = vmatprep.subr.mxu0 0.0
    %917 = vmatpush2.msra.mxu0 0.0
    %918 = vmatprep.subr.mxu0 0.0
    %919 = vmatpush2.msra.mxu0 0.0
    %920 = vmatprep.subr.mxu0 0.0
    %921 = vmatpush2.msra.mxu0 0.0
    %922 = vmatprep.subr.mxu0 0.0
    %923 = vmatpush2.msra.mxu0 0.0
    %924 = vmatprep.subr.mxu0 0.0
    %925 = vmatpush2.msra.mxu0 0.0
    %926 = vmatprep.subr.mxu0 0.0
    %927 = vmatpush2.msra.mxu0 0.0
    %928 = vmatprep.subr.mxu0 0.0
    %929 = vmatpush2.msra.mxu0 0.0
    %930 = vmatprep.subr.mxu0 0.0
    %931 = vmatpush2.msra.mxu0 0.0
    %932 = vmatprep.subr.mxu0 0.0
    %933 = vmatpush2.msra.mxu0 0.0
    %934 = vmatprep.subr.mxu0 0.0
    %935 = vmatpush2.msra.mxu0 0.0
    %936 = vmatprep.subr.mxu0 0.0
    %937 = vmatpush2.msra.mxu0 0.0
    %938 = vmatprep.mubr.f32.mxu0 0.0
    %939 = vmatmul.mubr.f32.gmra.mxu0 %v872
    %v940 = vpop.f32.mrf.mxu0
    %v941 = vadd.f32 %v870, %v940
    %v942 = vpop.f32.mrf.mxu0
    %943 = vdwg.mxu0
    %v944 = vxor.u32 %v941, 2147483648
    %v945 = vmul.f32 %v944, 1.442695
    %v946 = vpow.pop %v945
    %v947 = vadd.f32 %v946, 1.0
    %v948 = vrcp.pop %v947
    %v949 = vmul.f32 1.0, %v948
    %v950 = vtanh.pop %v941
    %v951 = vmul.f32 %v949, %v860
    %953 = vrot.lane.b32.xlu0 %v950, 32
    %v954 = vpop.permute.xlu0 %953
    %v956 = vmul.f32 %v949, %v954
    %958 = vrot.lane.b32.xlu0 %v956, 32
    %v959 = vpop.permute.xlu0 %958
    %v961 = vadd.f32 %v951, %v959
    %v962 = vtanh.pop %v961
    %964 = vrot.lane.b32.xlu0 %v962, 32
    %v965 = vpop.permute.xlu0 %964
    %v967 = vmul.f32 %v949, %v965
    %v968 = vlaneseq
    %v969 = vand.u32 %v968, 127
    %vm970 = vcmp.lt.s32.totalorder %v969, 16
    %973 = vrot.lane.b32.xlu0 %v967, 64
    %v974 = vpop.permute.xlu0 %973
    %v976 = vsel %vm970, %v263, %v974
    %vm977 = vcmask 254976
    %978 = vst.msk [vmem:[#allocation2] sm:$0x3] %vm977, %v976
    %v981 = vsel %vm970, %v365, %v869
    %982 = vst.msk [vmem:[#allocation2 + $0x2] sm:$0x3] %vm977, %v981
    %v985 = vsel %vm970, %v466, %v768
    %986 = vst.msk [vmem:[#allocation2 + $0x4] sm:$0x3] %vm977, %v985
    %v989 = vsel %vm970, %v567, %v666
    %990 = vst.msk [vmem:[#allocation2 + $0x6] sm:$0x3] %vm977, %v989
    %v991 = vsel %vm970, %v666, %v567
    %992 = vst.msk [vmem:[#allocation2 + $0x8] sm:$0x3] %vm977, %v991
    %v993 = vsel %vm970, %v768, %v466
    %994 = vst.msk [vmem:[#allocation2 + $0xa] sm:$0x3] %vm977, %v993
    %v995 = vsel %vm970, %v869, %v365
    %996 = vst.msk [vmem:[#allocation2 + $0xc] sm:$0x3] %vm977, %v995
    %v997 = vsel %vm970, %v974, %v263
    %998 = vst.msk [vmem:[#allocation2 + $0xe] sm:$0x3] %vm977, %v997
    %v999 = vld [vmem:[#allocation2] sm:$0xff]
    %v1000 = vld [vmem:[#allocation2 + $0x8] sm:$0xff]
    %v1001 = vld [vmem:[%s6] sm:$0xff]
    %v1002 = vld [vmem:[%s6 + $0x8] sm:$0xff]
    %v1003 = vld [vmem:[%s6 + $0x10] sm:$0xff]
    %v1004 = vld [vmem:[%s6 + $0x18] sm:$0xff]
    %v1005 = vld [vmem:[%s7] sm:$0x1]
    %v1007 = vlaneseq
    %v1008 = vshrl.u32 %v1007, 7
    %v1009 = vsub.s32 0, %v1008
    %v1010 = vrot.slane %v1005, %v1009
    %v1013 = vsel %vm72, %v999, 0
    %v1016 = vsel %vm72, %v1000, 0
    %1018 = vmatprep.subr.mxu0 0.0
    %1019 = vmatpush1.msra.mxu0 0.0
    %1020 = vmatprep.subr.mxu0 0.0
    %1021 = vmatpush1.msra.mxu0 0.0
    %1022 = vmatprep.subr.mxu0 0.0
    %1023 = vmatpush1.msra.mxu0 0.0
    %1024 = vmatprep.subr.mxu0 0.0
    %1025 = vmatpush1.msra.mxu0 0.0
    %1026 = vmatprep.subr.mxu0 0.0
    %1027 = vmatpush1.msra.mxu0 0.0
    %1028 = vmatprep.subr.mxu0 0.0
    %1029 = vmatpush1.msra.mxu0 0.0
    %1030 = vmatprep.subr.mxu0 0.0
    %1031 = vmatpush1.msra.mxu0 0.0
    %1032 = vmatprep.subr.mxu0 0.0
    %1033 = vmatpush1.msra.mxu0 0.0
    %1034 = vmatprep.subr.mxu0 0.0
    %1035 = vmatpush1.msra.mxu0 0.0
    %1036 = vmatprep.subr.mxu0 0.0
    %1037 = vmatpush1.msra.mxu0 0.0
    %1038 = vmatprep.subr.mxu0 0.0
    %1039 = vmatpush1.msra.mxu0 0.0
    %1040 = vmatprep.subr.mxu0 0.0
    %1041 = vmatpush1.msra.mxu0 0.0
    %1042 = vmatprep.subr.mxu0 0.0
    %1043 = vmatpush1.msra.mxu0 %v1004
    %1044 = vmatprep.subr.mxu0 0.0
    %1045 = vmatpush1.msra.mxu0 %v1003
    %1046 = vmatprep.subr.mxu0 0.0
    %1047 = vmatpush1.msra.mxu0 %v1002
    %1048 = vmatprep.subr.mxu0 0.0
    %1049 = vmatpush1.msra.mxu0 %v1001
    %1050 = vmatprep.subr.mxu0 0.0
    %1051 = vmatpush2.msra.mxu0 0.0
    %1052 = vmatprep.subr.mxu0 0.0
    %1053 = vmatpush2.msra.mxu0 0.0
    %1054 = vmatprep.subr.mxu0 0.0
    %1055 = vmatpush2.msra.mxu0 0.0
    %1056 = vmatprep.subr.mxu0 0.0
    %1057 = vmatpush2.msra.mxu0 0.0
    %1058 = vmatprep.subr.mxu0 0.0
    %1059 = vmatpush2.msra.mxu0 0.0
    %1060 = vmatprep.subr.mxu0 0.0
    %1061 = vmatpush2.msra.mxu0 0.0
    %1062 = vmatprep.subr.mxu0 0.0
    %1063 = vmatpush2.msra.mxu0 0.0
    %1064 = vmatprep.subr.mxu0 0.0
    %1065 = vmatpush2.msra.mxu0 0.0
    %1066 = vmatprep.subr.mxu0 0.0
    %1067 = vmatpush2.msra.mxu0 0.0
    %1068 = vmatprep.subr.mxu0 0.0
    %1069 = vmatpush2.msra.mxu0 0.0
    %1070 = vmatprep.subr.mxu0 0.0
    %1071 = vmatpush2.msra.mxu0 0.0
    %1072 = vmatprep.subr.mxu0 0.0
    %1073 = vmatpush2.msra.mxu0 0.0
    %1074 = vmatprep.subr.mxu0 0.0
    %1075 = vmatpush2.msra.mxu0 0.0
    %1076 = vmatprep.subr.mxu0 0.0
    %1077 = vmatpush2.msra.mxu0 0.0
    %1078 = vmatprep.subr.mxu0 0.0
    %1079 = vmatpush2.msra.mxu0 0.0
    %1080 = vmatprep.subr.mxu0 0.0
    %1081 = vmatpush2.msra.mxu0 0.0
    %1082 = vmatprep.mubr.f32.mxu0 0.0
    %1083 = vmatmul.mubr.f32.gmra.mxu0 %v1013
    %v1084 = vpop.f32.mrf.mxu0
    %v1085 = vadd.f32 %v1010, %v1084
    %v1086 = vpop.f32.mrf.mxu0
    %1087 = vmatprep.mubr.f32.mxu0 0.0
    %1088 = vmatmul.mubr.f32.gmra.mxu0 %v1016
    %v1089 = vpop.f32.mrf.mxu0
    %v1090 = vadd.f32 %v1010, %v1089
    %v1091 = vpop.f32.mrf.mxu0
    %1092 = vdwg.mxu0
    %vm1093 = vcmask 39936
    %v1094 = vsel %vm1093, %v1085, -inf
    %1095 = vmax.xlane.f32.xlu0 %v1094
    %v1096 = vpop.xlane.xlu0 %1095
    %v1097 = vsel %vm1093, %v1090, -inf
    %1098 = vmax.xlane.f32.xlu0 %v1097
    %v1099 = vpop.xlane.xlu0 %1098
    %vm1100 = vcmask 7168
    %1101 = vst.msk [vmem:[%s8] sm:$0xff] %vm1100, %v1096
    %1102 = vst.msk [vmem:[%s8 + $0x8] sm:$0xff] %vm1100, %v1099
    %vm1103 = vcmp.eq.f32.partialorder %v1085, %v1096
    %vm1104 = vcmp.eq.f32.partialorder %v1090, %v1099
    %v1105 = vsel %vm1103, %v969, 5
    %v1106 = vsel %vm1104, %v969, 5
    %v1107 = vsel %vm1093, %v1105, 2147483647
    %v1108 = vand.u32 %v1107, 65535
    %v1109 = vshra.s32 %v1107, 16
    %v1110 = vcvt.s32.f32 %v1108
    %v1111 = vcvt.s32.f32 %v1109
    %1112 = vmin.xlane.f32.xlu0 %v1111
    %v1113 = vpop.xlane.xlu0 %1112
    %vm1114 = vcmp.eq.f32.partialorder %v1111, %v1113
    %v1115 = vsel %vm1114, %v1110, inf
    %1116 = vmin.xlane.f32.xlu0 %v1115
    %v1117 = vpop.xlane.xlu0 %1116
    %v1118 = vcvt.f32.s32 %v1117
    %v1119 = vcvt.f32.s32 %v1113
    %v1120 = vshll.u32 %v1119, 16
    %v1121 = vadd.s32 %v1120, %v1118
    %v1122 = vsel %vm1093, %v1106, 2147483647
    %v1123 = vand.u32 %v1122, 65535
    %v1124 = vshra.s32 %v1122, 16
    %v1125 = vcvt.s32.f32 %v1123
    %v1126 = vcvt.s32.f32 %v1124
    %1127 = vmin.xlane.f32.xlu0 %v1126
    %v1128 = vpop.xlane.xlu0 %1127
    %vm1129 = vcmp.eq.f32.partialorder %v1126, %v1128
    %v1130 = vsel %vm1129, %v1125, inf
    %1131 = vmin.xlane.f32.xlu0 %v1130
    %v1132 = vpop.xlane.xlu0 %1131
    %v1133 = vcvt.f32.s32 %v1132
    %v1134 = vcvt.f32.s32 %v1128
    %v1135 = vshll.u32 %v1134, 16
    %v1136 = vadd.s32 %v1135, %v1133
    %1137 = vst.msk [vmem:[%s9] sm:$0xff] %vm1100, %v1121
    %1138 = vst.msk [vmem:[%s9 + $0x8] sm:$0xff] %vm1100, %v1136
    // Predicated region
    $region42: #{tpu_custom_call.1} parent=1 // pred_check
      _
    $region43: #{tpu_custom_call.1} parent=1 // pred_check_branch
      %1140 = sbr.rel (0) target = $region45
    $region44: #{tpu_custom_call.1} parent=1 // pred_region
      _
    $region45: #{tpu_custom_call.1} parent=1 // pred_fallthru
      _
    // Predicated region
    $region46: #{tpu_custom_call.1} parent=1 // pred_check
      _
    $region47: #{tpu_custom_call.1} parent=1 // pred_check_branch
      %1142 = sbr.rel (0) target = $region49
    $region48: #{tpu_custom_call.1} parent=1 // pred_region
      _
    $region49: #{tpu_custom_call.1} parent=1 // pred_fallthru
      _
    // Predicated region
    $region50: #{tpu_custom_call.1} parent=1 // pred_check
      _
    $region51: #{tpu_custom_call.1} parent=1 // pred_check_branch
      %1144 = sbr.rel (0) target = $region53
    $region52: #{tpu_custom_call.1} parent=1 // pred_region
      _
    $region53: #{tpu_custom_call.1} parent=1 // pred_fallthru
      _
    // Predicated region
    $region54: #{tpu_custom_call.1} parent=1 // pred_check
      _
    $region55: #{tpu_custom_call.1} parent=1 // pred_check_branch
      %1146 = sbr.rel (0) target = $region57
    $region56: #{tpu_custom_call.1} parent=1 // pred_region
      _
    $region57: #{tpu_custom_call.1} parent=1 // pred_fallthru
      _
    %1147 = vsyncpa [#allocation4], 1
    %1148 = vsyncpa [#allocation6], 1

</llo_original>
